<compile_context>
chip_gen: v7x
topology: tpu7x:2x2x1
jax: 0.10.0
libtpu: 0.0.40
codegen_flags: <defaults>
</compile_context>

<pallas_src>
import functools

import numpy as np
import jax
import jax.numpy as jnp
from jax.experimental import pallas as pl
from jax.experimental.pallas import tpu as pltpu


# ---------------------------------------------------------------------------
# Kernel: grid = (batch-blocks, heads).  Projections at h==0, per-head attention
# + fused fc accumulation every step.
# ---------------------------------------------------------------------------
def _mha_kernel(q_ref, k_ref, v_ref, mask_ref,
                wq_ref, bq_ref, wk_ref, bk_ref, wv_ref, bv_ref,
                wfc_ref, bfc_ref,
                out_ref, attn_ref,
                q_scr, k_scr, v_scr,
                *, n_head, d_att_k, d_att_v, inv_temp,
                compute_dtype, approx_recip):
    f32 = jnp.float32
    h = pl.program_id(1)
    Bt, Lq, Dq = q_ref.shape
    _, Lk, Dk = k_ref.shape
    _, _, Dv = v_ref.shape
    d_out = out_ref.shape[-1]
    dk, dv = d_att_k, d_att_v
    Mq, Mk = Bt * Lq, Bt * Lk

    @pl.when(h == 0)
    def _project_and_init():
        # Wide projections: all heads at once, M = Bt * L rows (batch folded into M).
        q2d = q_ref[...].reshape(Mq, Dq)
        qh_all = ((jnp.dot(q2d, wq_ref[...], preferred_element_type=f32)
                   + bq_ref[...]) * inv_temp).astype(compute_dtype)   # scale folded in
        k2d = k_ref[...].reshape(Mk, Dk)
        kh_all = (jnp.dot(k2d, wk_ref[...], preferred_element_type=f32)
                  + bk_ref[...]).astype(compute_dtype)
        v2d = v_ref[...].reshape(Mk, Dv)
        vh_all = (jnp.dot(v2d, wv_ref[...], preferred_element_type=f32)
                  + bv_ref[...]).astype(compute_dtype)
        # Stage head-major into VMEM scratch (persists across the head grid axis).
        for hh in range(n_head):
            q_scr[hh] = qh_all[:, hh * dk:(hh + 1) * dk].reshape(Bt, Lq, dk)
            k_scr[hh] = kh_all[:, hh * dk:(hh + 1) * dk].reshape(Bt, Lk, dk)
            v_scr[hh] = vh_all[:, hh * dv:(hh + 1) * dv].reshape(Bt, Lk, dv)
        # Initialize the resident output accumulator with the fc bias.
        out_ref[...] = jnp.broadcast_to(
            bfc_ref[...].reshape(1, 1, d_out), (Bt, Lq, d_out)).astype(f32)

    qh = q_scr[h]                      # (Bt, Lq, dk) compute_dtype (already * 1/temp)
    kh = k_scr[h]                      # (Bt, Lk, dk)
    vh = v_scr[h]                      # (Bt, Lk, dv)

    # Scores: batched QK^T, compute_dtype operands, f32 accumulation.
    scores = jnp.einsum("bqd,bkd->bqk", qh, kh,
                        preferred_element_type=f32)           # (Bt, Lq, Lk) f32

    mask = mask_ref[...] != 0                                  # (Bt, 1|Lq, Lk)
    masked = jnp.where(mask, jnp.float32(-1e30), scores)       # broadcasts over Lq

    # Softmax along keys, kept entirely in f32.
    m = jnp.max(masked, axis=-1, keepdims=True)
    e = jnp.exp(masked - m)
    denom = jnp.sum(e, axis=-1, keepdims=True)
    if approx_recip:
        p = e * pl.reciprocal(denom, approx=True)              # EUP slot, ~free
    else:
        p = e / denom                                          # exact (f32 path)

    attn_ref[0] = p.astype(attn_ref.dtype)

    # Context + fused output projection for this head, accumulated into out_ref.
    ctx = jnp.einsum("bqk,bkd->bqd", p.astype(compute_dtype), vh,
                     preferred_element_type=f32)               # (Bt, Lq, dv) f32
    out_ref[...] += jnp.dot(ctx.reshape(Mq, dv).astype(compute_dtype),
                            wfc_ref[h],
                            preferred_element_type=f32).reshape(Bt, Lq, d_out)


# ---------------------------------------------------------------------------
# VMEM sizing helpers
# ---------------------------------------------------------------------------
def _padded_bytes(shape, itemsize):
    shape = tuple(int(s) for s in shape)
    if len(shape) == 1:
        shape = (1,) + shape
    lead = 1
    for s in shape[:-2]:
        lead *= s
    sub = -(-shape[-2] // 8) * 8
    lane = -(-shape[-1] // 128) * 128
    return lead * sub * lane * itemsize


def _choose_bt_and_vmem(B, Lq, Lk, Lm, Dq, Dk, Dv, n_head, dk, dv, d_out,
                        compute_dtype, attn_dtype):
    cs = jnp.dtype(compute_dtype).itemsize
    asz = jnp.dtype(attn_dtype).itemsize

    weights = (_padded_bytes((Dq, n_head * dk), cs)
               + _padded_bytes((Dk, n_head * dk), cs)
               + _padded_bytes((Dv, n_head * dv), cs)
               + _padded_bytes((n_head, dv, d_out), cs)
               + 2 * _padded_bytes((1, n_head * dk), 4)
               + _padded_bytes((1, n_head * dv), 4)
               + _padded_bytes((1, d_out), 4))

    def estimate(bt):
        in_blk = (_padded_bytes((bt, Lq, Dq), cs)
                  + _padded_bytes((bt, Lk, Dk), cs)
                  + _padded_bytes((bt, Lk, Dv), cs)
                  + _padded_bytes((bt, Lm, Lk), 1))
        out_blk = (_padded_bytes((bt, Lq, d_out), 4)
                   + _padded_bytes((1, bt, Lq, Lk), asz))
        scr = (_padded_bytes((n_head, bt, Lq, dk), cs)
               + _padded_bytes((n_head, bt, Lk, dk), cs)
               + _padded_bytes((n_head, bt, Lk, dv), cs))
        # inputs/outputs/weights double-buffered by the pipeliner; scratch single.
        return 2 * (in_blk + out_blk + weights) + scr

    try:
        cap = int(pltpu.get_tpu_info().vmem_capacity_bytes)
    except Exception:
        cap = 64 * 1024 * 1024          # v7x-safe assumption
    budget = int(cap * 0.6)

    bt = 1
    for d in range(1, B + 1):
        if B % d == 0 and d * Lq <= 4096 and estimate(d) <= budget:
            bt = d                      # keep the largest divisor that fits

    vmem_limit = int(min(max(2 * estimate(bt), 32 * 1024 * 1024), int(cap * 0.9)))
    return bt, vmem_limit


# ---------------------------------------------------------------------------
# Wrapper
# ---------------------------------------------------------------------------
def multi_head_attention(q, k, v, mask, params, n_head, d_att_k, d_att_v,
                         compute_dtype=jnp.float32, attn_dtype=jnp.float32):
    """Pallas implementation of MultiHeadAttention.forward (eval mode)."""
    B, Lq, Dq = q.shape
    _, Lk, Dk = k.shape
    _, Lv, Dv = v.shape
    assert Lv == Lk, "key/value lengths must match"
    d_out = params["w_fc"].shape[1]
    inv_temp = float(1.0 / np.power(d_att_k, 0.5))

    if mask.ndim == 2:                  # (B, Lk) key-padding mask -> (B, 1, Lk)
        mask = mask[:, None, :]
    Lm = mask.shape[1]                  # 1 (key padding) or Lq (full mask)
    mask_i8 = mask.astype(jnp.int8)     # 4x less DMA than int32

    qc = q.astype(compute_dtype)
    kc = k.astype(compute_dtype)
    vc = v.astype(compute_dtype)
    wq = params["w_q"].astype(compute_dtype)
    wk = params["w_k"].astype(compute_dtype)
    wv = params["w_v"].astype(compute_dtype)
    wfc = params["w_fc"].reshape(n_head, d_att_v, d_out).astype(compute_dtype)
    bq = params["b_q"].reshape(1, n_head * d_att_k).astype(jnp.float32)
    bk = params["b_k"].reshape(1, n_head * d_att_k).astype(jnp.float32)
    bv = params["b_v"].reshape(1, n_head * d_att_v).astype(jnp.float32)
    bfc = params["b_fc"].reshape(1, d_out).astype(jnp.float32)

    Bt, vmem_limit = _choose_bt_and_vmem(
        B, Lq, Lk, Lm, Dq, Dk, Dv, n_head, d_att_k, d_att_v, d_out,
        compute_dtype, attn_dtype)

    kernel = functools.partial(
        _mha_kernel,
        n_head=n_head, d_att_k=d_att_k, d_att_v=d_att_v, inv_temp=inv_temp,
        compute_dtype=compute_dtype,
        approx_recip=(jnp.dtype(compute_dtype) != jnp.dtype(jnp.float32)))

    out, attn = pl.pallas_call(
        kernel,
        out_shape=(
            jax.ShapeDtypeStruct((B, Lq, d_out), jnp.float32),
            jax.ShapeDtypeStruct((n_head, B, Lq, Lk), attn_dtype),
        ),
        grid_spec=pltpu.PrefetchScalarGridSpec(
            num_scalar_prefetch=0,
            grid=(B // Bt, n_head),
            in_specs=[
                pl.BlockSpec((Bt, Lq, Dq), lambda b, h: (b, 0, 0)),               # q
                pl.BlockSpec((Bt, Lk, Dk), lambda b, h: (b, 0, 0)),               # k
                pl.BlockSpec((Bt, Lk, Dv), lambda b, h: (b, 0, 0)),               # v
                pl.BlockSpec((Bt, Lm, Lk), lambda b, h: (b, 0, 0)),               # mask
                # Weights: constant block index -> DMA'd once, resident thereafter.
                pl.BlockSpec((Dq, n_head * d_att_k), lambda b, h: (0, 0)),        # wq
                pl.BlockSpec((1, n_head * d_att_k), lambda b, h: (0, 0)),         # bq
                pl.BlockSpec((Dk, n_head * d_att_k), lambda b, h: (0, 0)),        # wk
                pl.BlockSpec((1, n_head * d_att_k), lambda b, h: (0, 0)),         # bk
                pl.BlockSpec((Dv, n_head * d_att_v), lambda b, h: (0, 0)),        # wv
                pl.BlockSpec((1, n_head * d_att_v), lambda b, h: (0, 0)),         # bv
                pl.BlockSpec((n_head, d_att_v, d_out), lambda b, h: (0, 0, 0)),   # wfc
                pl.BlockSpec((1, d_out), lambda b, h: (0, 0)),                    # bfc
            ],
            out_specs=[
                # Resident across the head axis -> f32 accumulator for the fused fc.
                pl.BlockSpec((Bt, Lq, d_out), lambda b, h: (b, 0, 0)),            # out
                pl.BlockSpec((1, Bt, Lq, Lk), lambda b, h: (h, b, 0, 0)),         # attn
            ],
            scratch_shapes=[
                pltpu.VMEM((n_head, Bt, Lq, d_att_k), compute_dtype),             # Q proj
                pltpu.VMEM((n_head, Bt, Lk, d_att_k), compute_dtype),             # K proj
                pltpu.VMEM((n_head, Bt, Lk, d_att_v), compute_dtype),             # V proj
            ],
        ),
        compiler_params=pltpu.CompilerParams(
            dimension_semantics=("parallel", "arbitrary"),
            vmem_limit_bytes=vmem_limit),
    )(qc, kc, vc, mask_i8, wq, bq, wk, bk, wv, bv, wfc, bfc)

    # (H, B, Lq, Lk) -> (H*B, Lq, Lk): head-major, matching the PyTorch module.
    attn_flat = attn.reshape(n_head * B, Lq, Lk)
    return out, attn_flat


# ---------------------------------------------------------------------------
# Pure-JAX reference (mirrors the PyTorch forward, eval mode, full precision)
# ---------------------------------------------------------------------------
def reference_forward(q, k, v, mask, params, n_head, d_att_k, d_att_v):
    B, Lq, _ = q.shape
    _, Lk, _ = k.shape
    temperature = np.power(d_att_k, 0.5)
    hp = "highest"

    qp = jnp.matmul(q, params["w_q"], precision=hp) + params["b_q"]
    kp = jnp.matmul(k, params["w_k"], precision=hp) + params["b_k"]
    vp = jnp.matmul(v, params["w_v"], precision=hp) + params["b_v"]

    qp = qp.reshape(B, Lq, n_head, d_att_k).transpose(2, 0, 1, 3).reshape(-1, Lq, d_att_k)
    kp = kp.reshape(B, Lk, n_head, d_att_k).transpose(2, 0, 1, 3).reshape(-1, Lk, d_att_k)
    vp = vp.reshape(B, Lk, n_head, d_att_v).transpose(2, 0, 1, 3).reshape(-1, Lk, d_att_v)

    mask_rep = jnp.tile(mask, (n_head, 1, 1))
    attn = jnp.einsum("bqd,bkd->bqk", qp, kp, precision=hp) / temperature
    attn = jnp.where(mask_rep, -jnp.inf, attn)
    attn = jax.nn.softmax(attn, axis=-1)
    out = jnp.einsum("bqk,bkd->bqd", attn, vp, precision=hp)

    out = out.reshape(n_head, B, Lq, d_att_v).transpose(1, 2, 0, 3).reshape(B, Lq, -1)
    out = jnp.matmul(out, params["w_fc"], precision=hp) + params["b_fc"]
    return out, attn


if __name__ == "__main__":
    # Small shapes consistent with the module
    B, Lq, Lk = 2, 8, 8
    d_q = d_k = d_v = 16
    d_out = 32
    n_head, d_att_k, d_att_v = 2, 8, 8

    key = jax.random.PRNGKey(0)
    keys = jax.random.split(key, 12)

    # Deterministic parameter init (shapes per the PyTorch __init__; stored as
    # (in_features, out_features) so forward is x @ W + b).
    params = {
        "w_q": (jax.random.normal(keys[0], (d_q, n_head * d_att_k), jnp.float32)
                * np.sqrt(2.0 / (d_q + d_att_k))),
        "b_q": jax.random.uniform(keys[1], (n_head * d_att_k,), jnp.float32,
                                  -1.0 / np.sqrt(d_q), 1.0 / np.sqrt(d_q)),
        "w_k": (jax.random.normal(keys[2], (d_k, n_head * d_att_k), jnp.float32)
                * np.sqrt(2.0 / (d_k + d_att_k))),
        "b_k": jax.random.uniform(keys[3], (n_head * d_att_k,), jnp.float32,
                                  -1.0 / np.sqrt(d_k), 1.0 / np.sqrt(d_k)),
        "w_v": (jax.random.normal(keys[4], (d_v, n_head * d_att_v), jnp.float32)
                * np.sqrt(2.0 / (d_v + d_att_v))),
        "b_v": jax.random.uniform(keys[5], (n_head * d_att_v,), jnp.float32,
                                  -1.0 / np.sqrt(d_v), 1.0 / np.sqrt(d_v)),
        "w_fc": (jax.random.normal(keys[6], (n_head * d_att_v, d_out), jnp.float32)
                 * np.sqrt(2.0 / (n_head * d_att_v + d_out))),
        "b_fc": jax.random.uniform(keys[7], (d_out,), jnp.float32,
                                   -1.0 / np.sqrt(n_head * d_att_v),
                                   1.0 / np.sqrt(n_head * d_att_v)),
    }

    q = jax.random.normal(keys[8], (B, Lq, d_q), jnp.float32)
    k = jax.random.normal(keys[9], (B, Lk, d_k), jnp.float32)
    v = jax.random.normal(keys[10], (B, Lk, d_v), jnp.float32)

    # key-padding style mask: batch 0 -> no padding, batch 1 -> last 2 keys masked
    key_pad = jnp.array([[False] * Lk,
                         [False] * (Lk - 2) + [True] * 2])          # (B, Lk)
    mask = jnp.broadcast_to(key_pad[:, None, :], (B, Lq, Lk))        # (B, Lq, Lk)

    ref_out, ref_attn = reference_forward(q, k, v, mask, params,
                                          n_head, d_att_k, d_att_v)

    # --- f32 compute path (exact-tolerance check) ---
    out, attn = multi_head_attention(q, k, v, mask, params,
                                     n_head, d_att_k, d_att_v,
                                     compute_dtype=jnp.float32,
                                     attn_dtype=jnp.float32)
    out = jax.block_until_ready(out)
    attn = jax.block_until_ready(attn)

    assert out.shape == (B, Lq, d_out)
    assert attn.shape == (n_head * B, Lq, Lk)
    np.testing.assert_allclose(np.asarray(out), np.asarray(ref_out),
                               rtol=1e-5, atol=1e-5)
    np.testing.assert_allclose(np.asarray(attn), np.asarray(ref_attn),
                               rtol=1e-5, atol=1e-5)

    # --- bf16 MXU path (v6e/v7x throughput mode), loose tolerance ---
    out_bf, attn_bf = multi_head_attention(q, k, v, mask, params,
                                           n_head, d_att_k, d_att_v,
                                           compute_dtype=jnp.bfloat16,
                                           attn_dtype=jnp.bfloat16)
    out_bf = jax.block_until_ready(out_bf)
    attn_bf = jax.block_until_ready(attn_bf)
    np.testing.assert_allclose(np.asarray(out_bf.astype(jnp.float32)),
                               np.asarray(ref_out), rtol=1e-1, atol=1e-1)
    np.testing.assert_allclose(np.asarray(attn_bf.astype(jnp.float32)),
                               np.asarray(ref_attn), rtol=1e-1, atol=1e-1)

    print("KERNEL_OK")
</pallas_src>

<mosaic_0001>
module attributes {stable_mosaic.version = 11 : i64} {
  func.func @_mha_kernel(%arg0: i32, %arg1: i32, %arg2: memref<2x8x16xf32, #tpu.memory_space<vmem>>, %arg3: memref<2x8x16xf32, #tpu.memory_space<vmem>>, %arg4: memref<2x8x16xf32, #tpu.memory_space<vmem>>, %arg5: memref<2x8x8xi8, #tpu.memory_space<vmem>>, %arg6: memref<16x16xf32, #tpu.memory_space<vmem>>, %arg7: memref<1x16xf32, #tpu.memory_space<vmem>>, %arg8: memref<16x16xf32, #tpu.memory_space<vmem>>, %arg9: memref<1x16xf32, #tpu.memory_space<vmem>>, %arg10: memref<16x16xf32, #tpu.memory_space<vmem>>, %arg11: memref<1x16xf32, #tpu.memory_space<vmem>>, %arg12: memref<2x8x32xf32, #tpu.memory_space<vmem>>, %arg13: memref<1x32xf32, #tpu.memory_space<vmem>>, %arg14: memref<2x8x32xf32, #tpu.memory_space<vmem>>, %arg15: memref<1x2x8x8xf32, #tpu.memory_space<vmem>>, %arg16: memref<2x2x8x8xf32, #tpu.memory_space<vmem>>, %arg17: memref<2x2x8x8xf32, #tpu.memory_space<vmem>>, %arg18: memref<2x2x8x8xf32, #tpu.memory_space<vmem>>) attributes {dimension_semantics = [#tpu.dimension_semantics<parallel>, #tpu.dimension_semantics<arbitrary>], iteration_bounds = array<i64: 1, 2>, scalar_prefetch = 0 : i64, scratch_operands = 3 : i64, tpu.core_type = #tpu.core_type<tc>, window_params = [{transform_indices = @transform_0, window_bounds = array<i64: 2, 8, 16>}, {transform_indices = @transform_1, window_bounds = array<i64: 2, 8, 16>}, {transform_indices = @transform_2, window_bounds = array<i64: 2, 8, 16>}, {transform_indices = @transform_3, window_bounds = array<i64: 2, 8, 8>}, {pipeline_mode = #tpu.pipeline_mode<synchronous>, transform_indices = @transform_4, window_bounds = array<i64: 16, 16>}, {pipeline_mode = #tpu.pipeline_mode<synchronous>, transform_indices = @transform_5, window_bounds = array<i64: 1, 16>}, {pipeline_mode = #tpu.pipeline_mode<synchronous>, transform_indices = @transform_6, window_bounds = array<i64: 16, 16>}, {pipeline_mode = #tpu.pipeline_mode<synchronous>, transform_indices = @transform_7, window_bounds = array<i64: 1, 16>}, {pipeline_mode = #tpu.pipeline_mode<synchronous>, transform_indices = @transform_8, window_bounds = array<i64: 16, 16>}, {pipeline_mode = #tpu.pipeline_mode<synchronous>, transform_indices = @transform_9, window_bounds = array<i64: 1, 16>}, {pipeline_mode = #tpu.pipeline_mode<synchronous>, transform_indices = @transform_10, window_bounds = array<i64: 2, 8, 32>}, {pipeline_mode = #tpu.pipeline_mode<synchronous>, transform_indices = @transform_11, window_bounds = array<i64: 1, 32>}, {transform_indices = @transform_12, window_bounds = array<i64: 2, 8, 32>}, {transform_indices = @transform_13, window_bounds = array<i64: 1, 2, 8, 8>}]} {
    %c0_i32 = arith.constant 0 : i32
    %0 = arith.cmpi eq, %arg1, %c0_i32 : i32
    %1 = arith.extui %0 : i1 to i32
    %c0_i32_0 = arith.constant 0 : i32
    %2 = arith.cmpi ne, %1, %c0_i32_0 : i32
    scf.if %2 {
      %c0_29 = arith.constant 0 : index
      %c0_30 = arith.constant 0 : index
      %c0_31 = arith.constant 0 : index
      %40 = vector.load %arg2[%c0_29, %c0_30, %c0_31] : memref<2x8x16xf32, #tpu.memory_space<vmem>>, vector<2x8x16xf32>
      %41 = vector.shape_cast %40 : vector<2x8x16xf32> to vector<16x16xf32>
      %c0_32 = arith.constant 0 : index
      %c0_33 = arith.constant 0 : index
      %42 = vector.load %arg6[%c0_32, %c0_33] : memref<16x16xf32, #tpu.memory_space<vmem>>, vector<16x16xf32>
      %cst_34 = arith.constant dense<0.000000e+00> : vector<16x16xf32>
      %43 = tpu.matmul %41, %42, %cst_34 {dimension_numbers = #tpu.dot_dimension_numbers<[1], [0], [0], [1], [0, 0, 1, 1], [], []>} : vector<16x16xf32>, vector<16x16xf32>, vector<16x16xf32> -> vector<16x16xf32>
      %c0_35 = arith.constant 0 : index
      %c0_36 = arith.constant 0 : index
      %44 = vector.load %arg7[%c0_35, %c0_36] : memref<1x16xf32, #tpu.memory_space<vmem>>, vector<1x16xf32>
      %45 = vector.broadcast %44 : vector<1x16xf32> to vector<16x16xf32>
      %46 = arith.addf %43, %45 : vector<16x16xf32>
      %cst_37 = arith.constant 0.353553385 : f32
      %47 = vector.broadcast %cst_37 : f32 to vector<16x16xf32>
      %48 = arith.mulf %46, %47 : vector<16x16xf32>
      %c0_38 = arith.constant 0 : index
      %c0_39 = arith.constant 0 : index
      %c0_40 = arith.constant 0 : index
      %49 = vector.load %arg3[%c0_38, %c0_39, %c0_40] : memref<2x8x16xf32, #tpu.memory_space<vmem>>, vector<2x8x16xf32>
      %50 = vector.shape_cast %49 : vector<2x8x16xf32> to vector<16x16xf32>
      %c0_41 = arith.constant 0 : index
      %c0_42 = arith.constant 0 : index
      %51 = vector.load %arg8[%c0_41, %c0_42] : memref<16x16xf32, #tpu.memory_space<vmem>>, vector<16x16xf32>
      %cst_43 = arith.constant dense<0.000000e+00> : vector<16x16xf32>
      %52 = tpu.matmul %50, %51, %cst_43 {dimension_numbers = #tpu.dot_dimension_numbers<[1], [0], [0], [1], [0, 0, 1, 1], [], []>} : vector<16x16xf32>, vector<16x16xf32>, vector<16x16xf32> -> vector<16x16xf32>
      %c0_44 = arith.constant 0 : index
      %c0_45 = arith.constant 0 : index
      %53 = vector.load %arg9[%c0_44, %c0_45] : memref<1x16xf32, #tpu.memory_space<vmem>>, vector<1x16xf32>
      %54 = vector.broadcast %53 : vector<1x16xf32> to vector<16x16xf32>
      %55 = arith.addf %52, %54 : vector<16x16xf32>
      %c0_46 = arith.constant 0 : index
      %c0_47 = arith.constant 0 : index
      %c0_48 = arith.constant 0 : index
      %56 = vector.load %arg4[%c0_46, %c0_47, %c0_48] : memref<2x8x16xf32, #tpu.memory_space<vmem>>, vector<2x8x16xf32>
      %57 = vector.shape_cast %56 : vector<2x8x16xf32> to vector<16x16xf32>
      %c0_49 = arith.constant 0 : index
      %c0_50 = arith.constant 0 : index
      %58 = vector.load %arg10[%c0_49, %c0_50] : memref<16x16xf32, #tpu.memory_space<vmem>>, vector<16x16xf32>
      %cst_51 = arith.constant dense<0.000000e+00> : vector<16x16xf32>
      %59 = tpu.matmul %57, %58, %cst_51 {dimension_numbers = #tpu.dot_dimension_numbers<[1], [0], [0], [1], [0, 0, 1, 1], [], []>} : vector<16x16xf32>, vector<16x16xf32>, vector<16x16xf32> -> vector<16x16xf32>
      %c0_52 = arith.constant 0 : index
      %c0_53 = arith.constant 0 : index
      %60 = vector.load %arg11[%c0_52, %c0_53] : memref<1x16xf32, #tpu.memory_space<vmem>>, vector<1x16xf32>
      %61 = vector.broadcast %60 : vector<1x16xf32> to vector<16x16xf32>
      %62 = arith.addf %59, %61 : vector<16x16xf32>
      %63 = vector.extract_strided_slice %48 {offsets = [0, 0], sizes = [16, 8], strides = [1, 1]} : vector<16x16xf32> to vector<16x8xf32>
      %64 = vector.shape_cast %63 : vector<16x8xf32> to vector<2x8x8xf32>
      %c0_54 = arith.constant 0 : index
      %c0_55 = arith.constant 0 : index
      %c0_56 = arith.constant 0 : index
      %c0_57 = arith.constant 0 : index
      %65 = vector.load %arg16[%c0_54, %c0_55, %c0_56, %c0_57] : memref<2x2x8x8xf32, #tpu.memory_space<vmem>>, vector<1x2x8x8xf32>
      %66 = vector.shape_cast %65 : vector<1x2x8x8xf32> to vector<2x8x8xf32>
      %67 = vector.shape_cast %64 : vector<2x8x8xf32> to vector<1x2x8x8xf32>
      tpu.vector_store %arg16[%c0_54, %c0_55, %c0_56, %c0_57], %67 {strides = array<i32>} : memref<2x2x8x8xf32, #tpu.memory_space<vmem>>, vector<1x2x8x8xf32>,
      %68 = vector.extract_strided_slice %55 {offsets = [0, 0], sizes = [16, 8], strides = [1, 1]} : vector<16x16xf32> to vector<16x8xf32>
      %69 = vector.shape_cast %68 : vector<16x8xf32> to vector<2x8x8xf32>
      %c0_58 = arith.constant 0 : index
      %c0_59 = arith.constant 0 : index
      %c0_60 = arith.constant 0 : index
      %c0_61 = arith.constant 0 : index
      %70 = vector.load %arg17[%c0_58, %c0_59, %c0_60, %c0_61] : memref<2x2x8x8xf32, #tpu.memory_space<vmem>>, vector<1x2x8x8xf32>
      %71 = vector.shape_cast %70 : vector<1x2x8x8xf32> to vector<2x8x8xf32>
      %72 = vector.shape_cast %69 : vector<2x8x8xf32> to vector<1x2x8x8xf32>
      tpu.vector_store %arg17[%c0_58, %c0_59, %c0_60, %c0_61], %72 {strides = array<i32>} : memref<2x2x8x8xf32, #tpu.memory_space<vmem>>, vector<1x2x8x8xf32>,
      %73 = vector.extract_strided_slice %62 {offsets = [0, 0], sizes = [16, 8], strides = [1, 1]} : vector<16x16xf32> to vector<16x8xf32>
      %74 = vector.shape_cast %73 : vector<16x8xf32> to vector<2x8x8xf32>
      %c0_62 = arith.constant 0 : index
      %c0_63 = arith.constant 0 : index
      %c0_64 = arith.constant 0 : index
      %c0_65 = arith.constant 0 : index
      %75 = vector.load %arg18[%c0_62, %c0_63, %c0_64, %c0_65] : memref<2x2x8x8xf32, #tpu.memory_space<vmem>>, vector<1x2x8x8xf32>
      %76 = vector.shape_cast %75 : vector<1x2x8x8xf32> to vector<2x8x8xf32>
      %77 = vector.shape_cast %74 : vector<2x8x8xf32> to vector<1x2x8x8xf32>
      tpu.vector_store %arg18[%c0_62, %c0_63, %c0_64, %c0_65], %77 {strides = array<i32>} : memref<2x2x8x8xf32, #tpu.memory_space<vmem>>, vector<1x2x8x8xf32>,
      %78 = vector.extract_strided_slice %48 {offsets = [0, 8], sizes = [16, 8], strides = [1, 1]} : vector<16x16xf32> to vector<16x8xf32>
      %79 = vector.shape_cast %78 : vector<16x8xf32> to vector<2x8x8xf32>
      %c1 = arith.constant 1 : index
      %c0_66 = arith.constant 0 : index
      %c0_67 = arith.constant 0 : index
      %c0_68 = arith.constant 0 : index
      %80 = vector.load %arg16[%c1, %c0_66, %c0_67, %c0_68] : memref<2x2x8x8xf32, #tpu.memory_space<vmem>>, vector<1x2x8x8xf32>
      %81 = vector.shape_cast %80 : vector<1x2x8x8xf32> to vector<2x8x8xf32>
      %82 = vector.shape_cast %79 : vector<2x8x8xf32> to vector<1x2x8x8xf32>
      tpu.vector_store %arg16[%c1, %c0_66, %c0_67, %c0_68], %82 {strides = array<i32>} : memref<2x2x8x8xf32, #tpu.memory_space<vmem>>, vector<1x2x8x8xf32>,
      %83 = vector.extract_strided_slice %55 {offsets = [0, 8], sizes = [16, 8], strides = [1, 1]} : vector<16x16xf32> to vector<16x8xf32>
      %84 = vector.shape_cast %83 : vector<16x8xf32> to vector<2x8x8xf32>
      %c1_69 = arith.constant 1 : index
      %c0_70 = arith.constant 0 : index
      %c0_71 = arith.constant 0 : index
      %c0_72 = arith.constant 0 : index
      %85 = vector.load %arg17[%c1_69, %c0_70, %c0_71, %c0_72] : memref<2x2x8x8xf32, #tpu.memory_space<vmem>>, vector<1x2x8x8xf32>
      %86 = vector.shape_cast %85 : vector<1x2x8x8xf32> to vector<2x8x8xf32>
      %87 = vector.shape_cast %84 : vector<2x8x8xf32> to vector<1x2x8x8xf32>
      tpu.vector_store %arg17[%c1_69, %c0_70, %c0_71, %c0_72], %87 {strides = array<i32>} : memref<2x2x8x8xf32, #tpu.memory_space<vmem>>, vector<1x2x8x8xf32>,
      %88 = vector.extract_strided_slice %62 {offsets = [0, 8], sizes = [16, 8], strides = [1, 1]} : vector<16x16xf32> to vector<16x8xf32>
      %89 = vector.shape_cast %88 : vector<16x8xf32> to vector<2x8x8xf32>
      %c1_73 = arith.constant 1 : index
      %c0_74 = arith.constant 0 : index
      %c0_75 = arith.constant 0 : index
      %c0_76 = arith.constant 0 : index
      %90 = vector.load %arg18[%c1_73, %c0_74, %c0_75, %c0_76] : memref<2x2x8x8xf32, #tpu.memory_space<vmem>>, vector<1x2x8x8xf32>
      %91 = vector.shape_cast %90 : vector<1x2x8x8xf32> to vector<2x8x8xf32>
      %92 = vector.shape_cast %89 : vector<2x8x8xf32> to vector<1x2x8x8xf32>
      tpu.vector_store %arg18[%c1_73, %c0_74, %c0_75, %c0_76], %92 {strides = array<i32>} : memref<2x2x8x8xf32, #tpu.memory_space<vmem>>, vector<1x2x8x8xf32>,
      %c0_77 = arith.constant 0 : index
      %c0_78 = arith.constant 0 : index
      %93 = vector.load %arg13[%c0_77, %c0_78] : memref<1x32xf32, #tpu.memory_space<vmem>>, vector<1x32xf32>
      %94 = vector.shape_cast %93 : vector<1x32xf32> to vector<1x1x32xf32>
      %95 = vector.shape_cast %94 : vector<1x1x32xf32> to vector<1x1x32xf32>
      %96 = vector.broadcast %95 : vector<1x1x32xf32> to vector<2x8x32xf32>
      %c0_79 = arith.constant 0 : index
      %c0_80 = arith.constant 0 : index
      %c0_81 = arith.constant 0 : index
      %97 = vector.load %arg14[%c0_79, %c0_80, %c0_81] : memref<2x8x32xf32, #tpu.memory_space<vmem>>, vector<2x8x32xf32>
      tpu.vector_store %arg14[%c0_79, %c0_80, %c0_81], %96 {strides = array<i32>} : memref<2x8x32xf32, #tpu.memory_space<vmem>>, vector<2x8x32xf32>,
    } else {
    }
    %3 = arith.index_cast %arg1 : i32 to index
    %c0 = arith.constant 0 : index
    %c0_1 = arith.constant 0 : index
    %c0_2 = arith.constant 0 : index
    %4 = vector.load %arg16[%3, %c0, %c0_1, %c0_2] : memref<2x2x8x8xf32, #tpu.memory_space<vmem>>, vector<1x2x8x8xf32>
    %5 = vector.shape_cast %4 : vector<1x2x8x8xf32> to vector<2x8x8xf32>
    %6 = arith.index_cast %arg1 : i32 to index
    %c0_3 = arith.constant 0 : index
    %c0_4 = arith.constant 0 : index
    %c0_5 = arith.constant 0 : index
    %7 = vector.load %arg17[%6, %c0_3, %c0_4, %c0_5] : memref<2x2x8x8xf32, #tpu.memory_space<vmem>>, vector<1x2x8x8xf32>
    %8 = vector.shape_cast %7 : vector<1x2x8x8xf32> to vector<2x8x8xf32>
    %9 = arith.index_cast %arg1 : i32 to index
    %c0_6 = arith.constant 0 : index
    %c0_7 = arith.constant 0 : index
    %c0_8 = arith.constant 0 : index
    %10 = vector.load %arg18[%9, %c0_6, %c0_7, %c0_8] : memref<2x2x8x8xf32, #tpu.memory_space<vmem>>, vector<1x2x8x8xf32>
    %11 = vector.shape_cast %10 : vector<1x2x8x8xf32> to vector<2x8x8xf32>
    "tpu.trace_start"() <{level = 10 : i32, message = "bqd,bkd->bqk"}> : () -> ()
    %cst = arith.constant dense<0.000000e+00> : vector<2x8x8xf32>
    %12 = tpu.matmul %5, %8, %cst {dimension_numbers = #tpu.dot_dimension_numbers<[2], [2], [1], [1], [0, 0, 0, 1, 1, 1], [0], [0]>} : vector<2x8x8xf32>, vector<2x8x8xf32>, vector<2x8x8xf32> -> vector<2x8x8xf32>
    "tpu.trace_stop"() : () -> ()
    %c0_9 = arith.constant 0 : index
    %c0_10 = arith.constant 0 : index
    %c0_11 = arith.constant 0 : index
    %13 = vector.load %arg5[%c0_9, %c0_10, %c0_11] : memref<2x8x8xi8, #tpu.memory_space<vmem>>, vector<2x8x8xi8>
    %c0_i8 = arith.constant 0 : i8
    %14 = vector.broadcast %c0_i8 : i8 to vector<2x8x8xi8>
    %15 = arith.cmpi ne, %13, %14 : vector<2x8x8xi8>
    %cst_12 = arith.constant -1.000000e+30 : f32
    %16 = vector.broadcast %cst_12 : f32 to vector<2x8x8xf32>
    %17 = arith.select %15, %16, %12 : vector<2x8x8xi1>, vector<2x8x8xf32>
    %cst_13 = arith.constant dense<0xFF800000> : vector<2x8xf32>
    %18 = vector.multi_reduction <maximumf>, %17, %cst_13 [2] : vector<2x8x8xf32> to vector<2x8xf32>
    %19 = vector.shape_cast %18 : vector<2x8xf32> to vector<2x8x1xf32>
    %20 = vector.broadcast %19 : vector<2x8x1xf32> to vector<2x8x8xf32>
    %21 = arith.subf %17, %20 : vector<2x8x8xf32>
    %22 = math.exp %21 : vector<2x8x8xf32>
    %cst_14 = arith.constant dense<0.000000e+00> : vector<2x8xf32>
    %23 = vector.multi_reduction <add>, %22, %cst_14 [2] : vector<2x8x8xf32> to vector<2x8xf32>
    %24 = vector.shape_cast %23 : vector<2x8xf32> to vector<2x8x1xf32>
    %25 = vector.broadcast %24 : vector<2x8x1xf32> to vector<2x8x8xf32>
    %26 = arith.divf %22, %25 : vector<2x8x8xf32>
    %c0_15 = arith.constant 0 : index
    %c0_16 = arith.constant 0 : index
    %c0_17 = arith.constant 0 : index
    %c0_18 = arith.constant 0 : index
    %27 = vector.load %arg15[%c0_15, %c0_16, %c0_17, %c0_18] : memref<1x2x8x8xf32, #tpu.memory_space<vmem>>, vector<1x2x8x8xf32>
    %28 = vector.shape_cast %27 : vector<1x2x8x8xf32> to vector<2x8x8xf32>
    %29 = vector.shape_cast %26 : vector<2x8x8xf32> to vector<1x2x8x8xf32>
    tpu.vector_store %arg15[%c0_15, %c0_16, %c0_17, %c0_18], %29 {strides = array<i32>} : memref<1x2x8x8xf32, #tpu.memory_space<vmem>>, vector<1x2x8x8xf32>,
    "tpu.trace_start"() <{level = 10 : i32, message = "bqk,bkd->bqd"}> : () -> ()
    %cst_19 = arith.constant dense<0.000000e+00> : vector<2x8x8xf32>
    %30 = tpu.matmul %26, %11, %cst_19 {dimension_numbers = #tpu.dot_dimension_numbers<[2], [1], [1], [2], [0, 0, 0, 1, 1, 2], [0], [0]>} : vector<2x8x8xf32>, vector<2x8x8xf32>, vector<2x8x8xf32> -> vector<2x8x8xf32>
    "tpu.trace_stop"() : () -> ()
    %c0_20 = arith.constant 0 : index
    %c0_21 = arith.constant 0 : index
    %c0_22 = arith.constant 0 : index
    %31 = vector.load %arg14[%c0_20, %c0_21, %c0_22] : memref<2x8x32xf32, #tpu.memory_space<vmem>>, vector<2x8x32xf32>
    %32 = vector.shape_cast %30 : vector<2x8x8xf32> to vector<16x8xf32>
    %33 = arith.index_cast %arg1 : i32 to index
    %c0_23 = arith.constant 0 : index
    %c0_24 = arith.constant 0 : index
    %34 = vector.load %arg12[%33, %c0_23, %c0_24] : memref<2x8x32xf32, #tpu.memory_space<vmem>>, vector<1x8x32xf32>
    %35 = vector.shape_cast %34 : vector<1x8x32xf32> to vector<8x32xf32>
    %cst_25 = arith.constant dense<0.000000e+00> : vector<16x32xf32>
    %36 = tpu.matmul %32, %35, %cst_25 {dimension_numbers = #tpu.dot_dimension_numbers<[1], [0], [0], [1], [0, 0, 1, 1], [], []>} : vector<16x8xf32>, vector<8x32xf32>, vector<16x32xf32> -> vector<16x32xf32>
    %37 = vector.shape_cast %36 : vector<16x32xf32> to vector<2x8x32xf32>
    %38 = arith.addf %31, %37 : vector<2x8x32xf32>
    %c0_26 = arith.constant 0 : index
    %c0_27 = arith.constant 0 : index
    %c0_28 = arith.constant 0 : index
    %39 = vector.load %arg14[%c0_26, %c0_27, %c0_28] : memref<2x8x32xf32, #tpu.memory_space<vmem>>, vector<2x8x32xf32>
    tpu.vector_store %arg14[%c0_26, %c0_27, %c0_28], %38 {strides = array<i32>} : memref<2x8x32xf32, #tpu.memory_space<vmem>>, vector<2x8x32xf32>,
    return
  }
  func.func @transform_0(%arg0: i32, %arg1: i32) -> (i32, i32, i32) {
    %c0_i32 = arith.constant 0 : i32
    %c0_i32_0 = arith.constant 0 : i32
    %c0_i32_1 = arith.constant 0 : i32
    return %arg0, %c0_i32, %c0_i32_0 : i32, i32, i32
  }
  func.func @transform_1(%arg0: i32, %arg1: i32) -> (i32, i32, i32) {
    %c0_i32 = arith.constant 0 : i32
    %c0_i32_0 = arith.constant 0 : i32
    %c0_i32_1 = arith.constant 0 : i32
    return %arg0, %c0_i32, %c0_i32_0 : i32, i32, i32
  }
  func.func @transform_2(%arg0: i32, %arg1: i32) -> (i32, i32, i32) {
    %c0_i32 = arith.constant 0 : i32
    %c0_i32_0 = arith.constant 0 : i32
    %c0_i32_1 = arith.constant 0 : i32
    return %arg0, %c0_i32, %c0_i32_0 : i32, i32, i32
  }
  func.func @transform_3(%arg0: i32, %arg1: i32) -> (i32, i32, i32) {
    %c0_i32 = arith.constant 0 : i32
    %c0_i32_0 = arith.constant 0 : i32
    %c0_i32_1 = arith.constant 0 : i32
    return %arg0, %c0_i32, %c0_i32_0 : i32, i32, i32
  }
  func.func @transform_4(%arg0: i32, %arg1: i32) -> (i32, i32) {
    %c0_i32 = arith.constant 0 : i32
    %c0_i32_0 = arith.constant 0 : i32
    %c0_i32_1 = arith.constant 0 : i32
    return %c0_i32, %c0_i32_0 : i32, i32
  }
  func.func @transform_5(%arg0: i32, %arg1: i32) -> (i32, i32) {
    %c0_i32 = arith.constant 0 : i32
    %c0_i32_0 = arith.constant 0 : i32
    %c0_i32_1 = arith.constant 0 : i32
    return %c0_i32, %c0_i32_0 : i32, i32
  }
  func.func @transform_6(%arg0: i32, %arg1: i32) -> (i32, i32) {
    %c0_i32 = arith.constant 0 : i32
    %c0_i32_0 = arith.constant 0 : i32
    %c0_i32_1 = arith.constant 0 : i32
    return %c0_i32, %c0_i32_0 : i32, i32
  }
  func.func @transform_7(%arg0: i32, %arg1: i32) -> (i32, i32) {
    %c0_i32 = arith.constant 0 : i32
    %c0_i32_0 = arith.constant 0 : i32
    %c0_i32_1 = arith.constant 0 : i32
    return %c0_i32, %c0_i32_0 : i32, i32
  }
  func.func @transform_8(%arg0: i32, %arg1: i32) -> (i32, i32) {
    %c0_i32 = arith.constant 0 : i32
    %c0_i32_0 = arith.constant 0 : i32
    %c0_i32_1 = arith.constant 0 : i32
    return %c0_i32, %c0_i32_0 : i32, i32
  }
  func.func @transform_9(%arg0: i32, %arg1: i32) -> (i32, i32) {
    %c0_i32 = arith.constant 0 : i32
    %c0_i32_0 = arith.constant 0 : i32
    %c0_i32_1 = arith.constant 0 : i32
    return %c0_i32, %c0_i32_0 : i32, i32
  }
  func.func @transform_10(%arg0: i32, %arg1: i32) -> (i32, i32, i32) {
    %c0_i32 = arith.constant 0 : i32
    %c0_i32_0 = arith.constant 0 : i32
    %c0_i32_1 = arith.constant 0 : i32
    %c0_i32_2 = arith.constant 0 : i32
    return %c0_i32, %c0_i32_0, %c0_i32_1 : i32, i32, i32
  }
  func.func @transform_11(%arg0: i32, %arg1: i32) -> (i32, i32) {
    %c0_i32 = arith.constant 0 : i32
    %c0_i32_0 = arith.constant 0 : i32
    %c0_i32_1 = arith.constant 0 : i32
    return %c0_i32, %c0_i32_0 : i32, i32
  }
  func.func @transform_12(%arg0: i32, %arg1: i32) -> (i32, i32, i32) {
    %c0_i32 = arith.constant 0 : i32
    %c0_i32_0 = arith.constant 0 : i32
    %c0_i32_1 = arith.constant 0 : i32
    return %arg0, %c0_i32, %c0_i32_0 : i32, i32, i32
  }
  func.func @transform_13(%arg0: i32, %arg1: i32) -> (i32, i32, i32, i32) {
    %c0_i32 = arith.constant 0 : i32
    %c0_i32_0 = arith.constant 0 : i32
    %c0_i32_1 = arith.constant 0 : i32
    return %arg1, %arg0, %c0_i32, %c0_i32_0 : i32, i32, i32, i32
  }
}

</mosaic_0001>

<llo_original>
// kernel: tpu_custom_call.1
$region0: #{tpu_custom_call.1}
  #allocation0 [shape = 'u32[]', space=smem, size = 0x4, offset = 0x4, fixed_abs, tag = 'smem constant byte address 0x4 - core index']
  #allocation1 [shape = 'u32[144,128]{1,0:T(1,128)}', space=vmem, size = 0x12000, scoped, tag = 'internal scratch']
  #allocation2 [shape = 'f32[2,2,8,8]{3,2,1,0:T(8,128)}', space=vmem, size = 0x4000, scoped, tag = 'scratch operand']
  #allocation3 [shape = 'f32[2,2,8,8]{3,2,1,0:T(8,128)}', space=vmem, size = 0x4000, scoped, tag = 'scratch operand']
  #allocation4 [shape = 'f32[2,2,8,8]{3,2,1,0:T(8,128)}', space=vmem, size = 0x4000, scoped, tag = 'scratch operand']
  %s0 = inlined_call_operand.hbm [shape: f32[2,8,16], index: 0, kind: input, shape index: {}]
  %s1 = inlined_call_operand.hbm [shape: f32[2,8,16], index: 1, kind: input, shape index: {}]
  %s2 = inlined_call_operand.hbm [shape: f32[2,8,16], index: 2, kind: input, shape index: {}]
  %s3 = inlined_call_operand.hbm [shape: s8[2,8,8], index: 3, kind: input, shape index: {}]
  %s4 = inlined_call_operand.hbm [shape: f32[16,16], index: 4, kind: input, shape index: {}]
  %s5 = inlined_call_operand.vmem [shape: f32[1,16], index: 5, kind: input, shape index: {}]
  %s6 = inlined_call_operand.vmem [shape: f32[16,16], index: 6, kind: input, shape index: {}]
  %s7 = inlined_call_operand.vmem [shape: f32[1,16], index: 7, kind: input, shape index: {}]
  %s8 = inlined_call_operand.hbm [shape: f32[16,16], index: 8, kind: input, shape index: {}]
  %s9 = inlined_call_operand.hbm [shape: f32[1,16], index: 9, kind: input, shape index: {}]
  %s10 = inlined_call_operand.vmem [shape: f32[2,8,32], index: 10, kind: input, shape index: {}]
  %s11 = inlined_call_operand.vmem [shape: f32[1,32], index: 11, kind: input, shape index: {}]
  %s12 = inlined_call_operand.hbm [shape: f32[2,8,32], index: 12, kind: output, shape index: {0}]
  %s13 = inlined_call_operand.hbm [shape: f32[2,2,8,8], index: 13, kind: output, shape index: {1}]
  %14 = xla_tuple %s12, %s13
  %s15 = sld [smem:[#allocation0]]
  $region121: #{tpu_custom_call.1} parent=0
    _
  %s17 = ssub.s32 1, %s15
  %s18 = scalar_select 0, %s17, %s15
  $region1: #{tpu_custom_call.1} parent=0
    #allocation5 [shape = 'u8[8192]{0}', space=vmem, size = 0x2000, scoped, tag = 'input window, operand 0, single buffered']
    #allocation6 [shape = 's32[2]{0}', space=sflag, size = 0x8, scoped, tag = 'scoped memory for tpu_custom_call.1']
    #allocation7 [shape = 's32[2]{0}', space=sflag, size = 0x8, scoped, tag = 'scoped memory for tpu_custom_call.1']
    #allocation8 [shape = 'u8[8192]{0}', space=vmem, size = 0x2000, scoped, tag = 'input window, operand 1, single buffered']
    #allocation9 [shape = 's32[1]{0}', space=sflag, size = 0x4, scoped, tag = 'scoped memory for tpu_custom_call.1']
    #allocation10 [shape = 'u8[8192]{0}', space=vmem, size = 0x2000, scoped, tag = 'input window, operand 2, single buffered']
    #allocation11 [shape = 'u8[2048]{0}', space=vmem, size = 0x800, scoped, tag = 'input window, operand 3, single buffered']
    #allocation12 [shape = 's32[1]{0}', space=sflag, size = 0x4, scoped, tag = 'scoped memory for tpu_custom_call.1']
    #allocation13 [shape = 'u8[8192]{0}', space=vmem, size = 0x2000, scoped, tag = 'input window, operand 4, single buffered']
    #allocation14 [shape = 'u8[8192]{0}', space=vmem, size = 0x2000, scoped, tag = 'input window, operand 8, single buffered']
    #allocation15 [shape = 's32[1]{0}', space=sflag, size = 0x4, scoped, tag = 'scoped memory for tpu_custom_call.1']
    #allocation16 [shape = 'u8[512]{0}', space=vmem, size = 0x400, scoped, tag = 'input window, operand 9, single buffered']
    #allocation17 [shape = 'u8[8192]{0}', space=vmem, size = 0x2000, scoped, tag = 'output window, operand 0, single buffered']
    #allocation18 [shape = 'u8[16384]{0}', space=vmem, size = 0x4000, scoped, tag = 'output window, operand 1']
    #allocation19 [shape = 's32[2]{0}', space=sflag, size = 0x8, scoped, tag = 'scoped memory for tpu_custom_call.1']
    %19 = vsyncpa [#allocation6], 0
    %20 = vsyncpa [#allocation9], 0
    %21 = vsyncpa [#allocation12], 0
    %22 = vsyncpa [#allocation15], 0
    %23 = vsyncpa [#allocation7], 0
    %24 = vsyncpa [#allocation19], 0
    %s25 = scalar_lea.sflag [#allocation19], 1
    %26 = vsyncpa %s25, 0
    loop: start=0, step=1, limit=4
    $region2: #{tpu_custom_call.1} parent=1 // loop_pre_header
      _
    $region3: #{tpu_custom_call.1} parent=1 // loop_header
      %s28 = sphi 0, %s32
      %p29 = scmp.ge.s32.totalorder %s28, 4
      %s35 = sphi 0, %s47
      %s36 = sphi 0, %s43
      %s37 = sphi 0, %s35
      %s38 = sphi 0, %s36
      %s39 = sphi 0, %s37
      %s40 = sphi 0, %s38
      %s50 = sphi 0, %s52
      %s53 = sphi 0, %s50
      %s54 = sphi 0, %s53
      %s70 = sphi 0, %s54
      %s76 = sphi 0, %s78
      %s79 = sphi 0, %s76
      %s80 = sphi 0, %s79
      %s96 = sphi 0, %s80
      %s102 = sphi 0, %s104
      %s105 = sphi 0, %s102
      %s106 = sphi 0, %s105
      %s122 = sphi 0, %s106
      %s128 = sphi 0, %s130
      %s131 = sphi 0, %s128
      %s132 = sphi 0, %s131
      %s148 = sphi 0, %s132
      %s152 = sphi 0, %s152
      %s154 = sphi 0, %s152
      %s155 = sphi 0, %s154
      %s169 = sphi 0, %s155
      %s173 = sphi 0, %s173
      %s175 = sphi 0, %s173
      %s176 = sphi 0, %s175
      %s190 = sphi 0, %s176
      %s194 = sphi 0, %s194
      %s196 = sphi 0, %s194
      %s197 = sphi 0, %s196
      %s211 = sphi 0, %s197
      %s215 = sphi 0, %s215
      %s217 = sphi 0, %s215
      %s218 = sphi 0, %s217
      %s232 = sphi 0, %s218
      %s236 = sphi 0, %s236
      %s238 = sphi 0, %s236
      %s239 = sphi 0, %s238
      %s253 = sphi 0, %s239
      %s257 = sphi 0, %s257
      %s259 = sphi 0, %s257
      %s260 = sphi 0, %s259
      %s274 = sphi 0, %s260
      %s278 = sphi 0, %s278
      %s280 = sphi 0, %s278
      %s281 = sphi 0, %s280
      %s295 = sphi 0, %s281
      %s299 = sphi 0, %s299
      %s301 = sphi 0, %s299
      %s302 = sphi 0, %s301
      %s316 = sphi 0, %s302
      %s322 = sphi 0, %s324
      %s325 = sphi 0, %s322
      %s326 = sphi 0, %s325
      %s342 = sphi 0, %s326
      %s350 = sphi 0, %s352
      %s353 = sphi 0, %s350
      %s354 = sphi 0, %s353
      %s370 = sphi 0, %s354
    $region4: #{tpu_custom_call.1} parent=1 // loop_header_branch
      %31 = sbr.rel (%p29) target = $region8
    $region5: #{tpu_custom_call.1} parent=1 // loop_body
      %s33 = ssub.s32 %s28, 1
      %s34 = ssub.s32 %s28, 2
      %s41 = sadd.s32 1, %s36
      %p42 = scmp.ge.s32.totalorder %s41, 2
      %s43 = scalar_select %p42, 0, %s41
      %s44 = sadd.s32 1, %s35
      %s45 = scalar_select %p42, %s44, %s35
      %p46 = scmp.ge.s32.totalorder %s45, 1
      %s47 = scalar_select %p46, 0, %s45
      %s48 = ssub.s32 %s35, %s47
      %p49 = scmp.eq.s32.totalorder %s48, 0
      %s51 = sadd.s32 %s50, 1
      %s52 = scalar_select %p49, %s50, %s51
      %p55 = pneg %p49
      %p56 = scmp.eq.s32.totalorder %s28, 1
      %p57 = por %p55, %p56
      %p58 = scmp.ne.s32.totalorder %s50, %s53
      %p59 = scmp.eq.s32.totalorder %s28, 0
      %p60 = por %p58, %p59
      %p61 = scmp.ne.s32.totalorder %s50, %s53
      %p62 = scmp.eq.s32.totalorder %s33, 1
      %p63 = por %p61, %p62
      %p64 = scmp.ne.s32.totalorder %s53, %s54
      %p65 = scmp.eq.s32.totalorder %s33, 0
      %p66 = por %p64, %p65
      %p67 = scmp.ne.s32.totalorder %s53, %s54
      %p68 = scmp.eq.s32.totalorder %s34, 1
      %p69 = por %p67, %p68
      %p71 = scmp.ne.s32.totalorder %s54, %s70
      %p72 = scmp.eq.s32.totalorder %s34, 0
      %p73 = por %p71, %p72
      %s74 = ssub.s32 %s35, %s47
      %p75 = scmp.eq.s32.totalorder %s74, 0
      %s77 = sadd.s32 %s76, 1
      %s78 = scalar_select %p75, %s76, %s77
      %p81 = pneg %p75
      %p82 = scmp.eq.s32.totalorder %s28, 1
      %p83 = por %p81, %p82
      %p84 = scmp.ne.s32.totalorder %s76, %s79
      %p85 = scmp.eq.s32.totalorder %s28, 0
      %p86 = por %p84, %p85
      %p87 = scmp.ne.s32.totalorder %s76, %s79
      %p88 = scmp.eq.s32.totalorder %s33, 1
      %p89 = por %p87, %p88
      %p90 = scmp.ne.s32.totalorder %s79, %s80
      %p91 = scmp.eq.s32.totalorder %s33, 0
      %p92 = por %p90, %p91
      %p93 = scmp.ne.s32.totalorder %s79, %s80
      %p94 = scmp.eq.s32.totalorder %s34, 1
      %p95 = por %p93, %p94
      %p97 = scmp.ne.s32.totalorder %s80, %s96
      %p98 = scmp.eq.s32.totalorder %s34, 0
      %p99 = por %p97, %p98
      %s100 = ssub.s32 %s35, %s47
      %p101 = scmp.eq.s32.totalorder %s100, 0
      %s103 = sadd.s32 %s102, 1
      %s104 = scalar_select %p101, %s102, %s103
      %p107 = pneg %p101
      %p108 = scmp.eq.s32.totalorder %s28, 1
      %p109 = por %p107, %p108
      %p110 = scmp.ne.s32.totalorder %s102, %s105
      %p111 = scmp.eq.s32.totalorder %s28, 0
      %p112 = por %p110, %p111
      %p113 = scmp.ne.s32.totalorder %s102, %s105
      %p114 = scmp.eq.s32.totalorder %s33, 1
      %p115 = por %p113, %p114
      %p116 = scmp.ne.s32.totalorder %s105, %s106
      %p117 = scmp.eq.s32.totalorder %s33, 0
      %p118 = por %p116, %p117
      %p119 = scmp.ne.s32.totalorder %s105, %s106
      %p120 = scmp.eq.s32.totalorder %s34, 1
      %p121 = por %p119, %p120
      %p123 = scmp.ne.s32.totalorder %s106, %s122
      %p124 = scmp.eq.s32.totalorder %s34, 0
      %p125 = por %p123, %p124
      %s126 = ssub.s32 %s35, %s47
      %p127 = scmp.eq.s32.totalorder %s126, 0
      %s129 = sadd.s32 %s128, 1
      %s130 = scalar_select %p127, %s128, %s129
      %p133 = pneg %p127
      %p134 = scmp.eq.s32.totalorder %s28, 1
      %p135 = por %p133, %p134
      %p136 = scmp.ne.s32.totalorder %s128, %s131
      %p137 = scmp.eq.s32.totalorder %s28, 0
      %p138 = por %p136, %p137
      %p139 = scmp.ne.s32.totalorder %s128, %s131
      %p140 = scmp.eq.s32.totalorder %s33, 1
      %p141 = por %p139, %p140
      %p142 = scmp.ne.s32.totalorder %s131, %s132
      %p143 = scmp.eq.s32.totalorder %s33, 0
      %p144 = por %p142, %p143
      %p145 = scmp.ne.s32.totalorder %s131, %s132
      %p146 = scmp.eq.s32.totalorder %s34, 1
      %p147 = por %p145, %p146
      %p149 = scmp.ne.s32.totalorder %s132, %s148
      %p150 = scmp.eq.s32.totalorder %s34, 0
      %p151 = por %p149, %p150
      %s153 = sadd.s32 %s152, 1
      %p156 = scmp.eq.s32.totalorder %s28, 1
      %p157 = scmp.ne.s32.totalorder %s152, %s154
      %p158 = scmp.eq.s32.totalorder %s28, 0
      %p159 = por %p157, %p158
      %p160 = scmp.ne.s32.totalorder %s152, %s154
      %p161 = scmp.eq.s32.totalorder %s33, 1
      %p162 = por %p160, %p161
      %p163 = scmp.ne.s32.totalorder %s154, %s155
      %p164 = scmp.eq.s32.totalorder %s33, 0
      %p165 = por %p163, %p164
      %p166 = scmp.ne.s32.totalorder %s154, %s155
      %p167 = scmp.eq.s32.totalorder %s34, 1
      %p168 = por %p166, %p167
      %p170 = scmp.ne.s32.totalorder %s155, %s169
      %p171 = scmp.eq.s32.totalorder %s34, 0
      %p172 = por %p170, %p171
      %s174 = sadd.s32 %s173, 1
      %p177 = scmp.eq.s32.totalorder %s28, 1
      %p178 = scmp.ne.s32.totalorder %s173, %s175
      %p179 = scmp.eq.s32.totalorder %s28, 0
      %p180 = por %p178, %p179
      %p181 = scmp.ne.s32.totalorder %s173, %s175
      %p182 = scmp.eq.s32.totalorder %s33, 1
      %p183 = por %p181, %p182
      %p184 = scmp.ne.s32.totalorder %s175, %s176
      %p185 = scmp.eq.s32.totalorder %s33, 0
      %p186 = por %p184, %p185
      %p187 = scmp.ne.s32.totalorder %s175, %s176
      %p188 = scmp.eq.s32.totalorder %s34, 1
      %p189 = por %p187, %p188
      %p191 = scmp.ne.s32.totalorder %s176, %s190
      %p192 = scmp.eq.s32.totalorder %s34, 0
      %p193 = por %p191, %p192
      %s195 = sadd.s32 %s194, 1
      %p198 = scmp.eq.s32.totalorder %s28, 1
      %p199 = scmp.ne.s32.totalorder %s194, %s196
      %p200 = scmp.eq.s32.totalorder %s28, 0
      %p201 = por %p199, %p200
      %p202 = scmp.ne.s32.totalorder %s194, %s196
      %p203 = scmp.eq.s32.totalorder %s33, 1
      %p204 = por %p202, %p203
      %p205 = scmp.ne.s32.totalorder %s196, %s197
      %p206 = scmp.eq.s32.totalorder %s33, 0
      %p207 = por %p205, %p206
      %p208 = scmp.ne.s32.totalorder %s196, %s197
      %p209 = scmp.eq.s32.totalorder %s34, 1
      %p210 = por %p208, %p209
      %p212 = scmp.ne.s32.totalorder %s197, %s211
      %p213 = scmp.eq.s32.totalorder %s34, 0
      %p214 = por %p212, %p213
      %s216 = sadd.s32 %s215, 1
      %p219 = scmp.eq.s32.totalorder %s28, 1
      %p220 = scmp.ne.s32.totalorder %s215, %s217
      %p221 = scmp.eq.s32.totalorder %s28, 0
      %p222 = por %p220, %p221
      %p223 = scmp.ne.s32.totalorder %s215, %s217
      %p224 = scmp.eq.s32.totalorder %s33, 1
      %p225 = por %p223, %p224
      %p226 = scmp.ne.s32.totalorder %s217, %s218
      %p227 = scmp.eq.s32.totalorder %s33, 0
      %p228 = por %p226, %p227
      %p229 = scmp.ne.s32.totalorder %s217, %s218
      %p230 = scmp.eq.s32.totalorder %s34, 1
      %p231 = por %p229, %p230
      %p233 = scmp.ne.s32.totalorder %s218, %s232
      %p234 = scmp.eq.s32.totalorder %s34, 0
      %p235 = por %p233, %p234
      %s237 = sadd.s32 %s236, 1
      %p240 = scmp.eq.s32.totalorder %s28, 1
      %p241 = scmp.ne.s32.totalorder %s236, %s238
      %p242 = scmp.eq.s32.totalorder %s28, 0
      %p243 = por %p241, %p242
      %p244 = scmp.ne.s32.totalorder %s236, %s238
      %p245 = scmp.eq.s32.totalorder %s33, 1
      %p246 = por %p244, %p245
      %p247 = scmp.ne.s32.totalorder %s238, %s239
      %p248 = scmp.eq.s32.totalorder %s33, 0
      %p249 = por %p247, %p248
      %p250 = scmp.ne.s32.totalorder %s238, %s239
      %p251 = scmp.eq.s32.totalorder %s34, 1
      %p252 = por %p250, %p251
      %p254 = scmp.ne.s32.totalorder %s239, %s253
      %p255 = scmp.eq.s32.totalorder %s34, 0
      %p256 = por %p254, %p255
      %s258 = sadd.s32 %s257, 1
      %p261 = scmp.eq.s32.totalorder %s28, 1
      %p262 = scmp.ne.s32.totalorder %s257, %s259
      %p263 = scmp.eq.s32.totalorder %s28, 0
      %p264 = por %p262, %p263
      %p265 = scmp.ne.s32.totalorder %s257, %s259
      %p266 = scmp.eq.s32.totalorder %s33, 1
      %p267 = por %p265, %p266
      %p268 = scmp.ne.s32.totalorder %s259, %s260
      %p269 = scmp.eq.s32.totalorder %s33, 0
      %p270 = por %p268, %p269
      %p271 = scmp.ne.s32.totalorder %s259, %s260
      %p272 = scmp.eq.s32.totalorder %s34, 1
      %p273 = por %p271, %p272
      %p275 = scmp.ne.s32.totalorder %s260, %s274
      %p276 = scmp.eq.s32.totalorder %s34, 0
      %p277 = por %p275, %p276
      %s279 = sadd.s32 %s278, 1
      %p282 = scmp.eq.s32.totalorder %s28, 1
      %p283 = scmp.ne.s32.totalorder %s278, %s280
      %p284 = scmp.eq.s32.totalorder %s28, 0
      %p285 = por %p283, %p284
      %p286 = scmp.ne.s32.totalorder %s278, %s280
      %p287 = scmp.eq.s32.totalorder %s33, 1
      %p288 = por %p286, %p287
      %p289 = scmp.ne.s32.totalorder %s280, %s281
      %p290 = scmp.eq.s32.totalorder %s33, 0
      %p291 = por %p289, %p290
      %p292 = scmp.ne.s32.totalorder %s280, %s281
      %p293 = scmp.eq.s32.totalorder %s34, 1
      %p294 = por %p292, %p293
      %p296 = scmp.ne.s32.totalorder %s281, %s295
      %p297 = scmp.eq.s32.totalorder %s34, 0
      %p298 = por %p296, %p297
      %s300 = sadd.s32 %s299, 1
      %p303 = scmp.eq.s32.totalorder %s28, 1
      %p304 = scmp.ne.s32.totalorder %s299, %s301
      %p305 = scmp.eq.s32.totalorder %s28, 0
      %p306 = por %p304, %p305
      %p307 = scmp.ne.s32.totalorder %s299, %s301
      %p308 = scmp.eq.s32.totalorder %s33, 1
      %p309 = por %p307, %p308
      %p310 = scmp.ne.s32.totalorder %s301, %s302
      %p311 = scmp.eq.s32.totalorder %s33, 0
      %p312 = por %p310, %p311
      %p313 = scmp.ne.s32.totalorder %s301, %s302
      %p314 = scmp.eq.s32.totalorder %s34, 1
      %p315 = por %p313, %p314
      %p317 = scmp.ne.s32.totalorder %s302, %s316
      %p318 = scmp.eq.s32.totalorder %s34, 0
      %p319 = por %p317, %p318
      %s320 = ssub.s32 %s35, %s47
      %p321 = scmp.eq.s32.totalorder %s320, 0
      %s323 = sadd.s32 %s322, 1
      %s324 = scalar_select %p321, %s322, %s323
      %p327 = pneg %p321
      %p328 = scmp.eq.s32.totalorder %s28, 1
      %p329 = por %p327, %p328
      %p330 = scmp.ne.s32.totalorder %s322, %s325
      %p331 = scmp.eq.s32.totalorder %s28, 0
      %p332 = por %p330, %p331
      %p333 = scmp.ne.s32.totalorder %s322, %s325
      %p334 = scmp.eq.s32.totalorder %s33, 1
      %p335 = por %p333, %p334
      %p336 = scmp.ne.s32.totalorder %s325, %s326
      %p337 = scmp.eq.s32.totalorder %s33, 0
      %p338 = por %p336, %p337
      %p339 = scmp.ne.s32.totalorder %s325, %s326
      %p340 = scmp.eq.s32.totalorder %s34, 1
      %p341 = por %p339, %p340
      %p343 = scmp.ne.s32.totalorder %s326, %s342
      %p344 = scmp.eq.s32.totalorder %s34, 0
      %p345 = por %p343, %p344
      %s346 = ssub.s32 %s36, %s43
      %s347 = ssub.s32 %s35, %s47
      %s348 = sor.u32 %s346, %s347
      %p349 = scmp.eq.s32.totalorder %s348, 0
      %s351 = sadd.s32 %s350, 1
      %s352 = scalar_select %p349, %s350, %s351
      %p355 = pneg %p349
      %p356 = scmp.eq.s32.totalorder %s28, 1
      %p357 = por %p355, %p356
      %p358 = scmp.ne.s32.totalorder %s350, %s353
      %p359 = scmp.eq.s32.totalorder %s28, 0
      %p360 = por %p358, %p359
      %p361 = scmp.ne.s32.totalorder %s350, %s353
      %p362 = scmp.eq.s32.totalorder %s33, 1
      %p363 = por %p361, %p362
      %p364 = scmp.ne.s32.totalorder %s353, %s354
      %p365 = scmp.eq.s32.totalorder %s33, 0
      %p366 = por %p364, %p365
      %p367 = scmp.ne.s32.totalorder %s353, %s354
      %p368 = scmp.eq.s32.totalorder %s34, 1
      %p369 = por %p367, %p368
      %p371 = scmp.ne.s32.totalorder %s354, %s370
      %p372 = scmp.eq.s32.totalorder %s34, 0
      %p373 = por %p371, %p372
      %p374 = scmp.le.s32.totalorder 1, %s28
      %p375 = scmp.lt.s32.totalorder %s28, 3
      %p376 = pnand %p374, %p375
      %p377 = pneg %p376
      // Predicated region
      $region9: #{tpu_custom_call.1} parent=5 // pred_check
        _
      $region10: #{tpu_custom_call.1} parent=5 // pred_check_branch
        %379 = sbr.rel (%p376) target = $region12
      $region11: #{tpu_custom_call.1} parent=5 // pred_region
        %s380 = ssub.s32 %s28, 1
        // Predicated region
        $region13: #{tpu_custom_call.1} parent=11 // pred_check
          %p381 = pneg %p66
        $region14: #{tpu_custom_call.1} parent=11 // pred_check_branch
          %383 = sbr.rel (%p381) target = $region16
        $region15: #{tpu_custom_call.1} parent=11 // pred_region
          %s384 = smul.u32 2, %s37
          %s386 = ssub.s32 256, 256
          %387 = vsyncadd [#allocation6], %s386
          %s388 = smul.addr %s384, 128
          %s389 = scalar_lea.hbm %s0, %s388
          %s390 = sshll.u32 [#allocation5], 4
          %s391 = int_to_ptr.vmem [resolvable:$true] %s390
          %396 = dma.hbm_to_vmem [thread:$0]  %s389, 256, %s391, [#allocation6], 128, 128, 8
        $region16: #{tpu_custom_call.1} parent=11 // pred_fallthru
          _
        // Predicated region
        $region17: #{tpu_custom_call.1} parent=11 // pred_check
          %p397 = pneg %p92
        $region18: #{tpu_custom_call.1} parent=11 // pred_check_branch
          %399 = sbr.rel (%p397) target = $region20
        $region19: #{tpu_custom_call.1} parent=11 // pred_region
          %s400 = smul.u32 2, %s37
          %s402 = ssub.s32 256, 256
          %403 = vsyncadd [#allocation9], %s402
          %s404 = smul.addr %s400, 128
          %s405 = scalar_lea.hbm %s1, %s404
          %s406 = sshll.u32 [#allocation8], 4
          %s407 = int_to_ptr.vmem [resolvable:$true] %s406
          %412 = dma.hbm_to_vmem [thread:$0]  %s405, 256, %s407, [#allocation9], 128, 128, 8
        $region20: #{tpu_custom_call.1} parent=11 // pred_fallthru
          _
        // Predicated region
        $region21: #{tpu_custom_call.1} parent=11 // pred_check
          %p413 = pneg %p118
        $region22: #{tpu_custom_call.1} parent=11 // pred_check_branch
          %415 = sbr.rel (%p413) target = $region24
        $region23: #{tpu_custom_call.1} parent=11 // pred_region
          %s416 = smul.u32 2, %s37
          %s418 = ssub.s32 256, 256
          %419 = vsyncadd [#allocation9], %s418
          %s420 = smul.addr %s416, 128
          %s421 = scalar_lea.hbm %s2, %s420
          %s422 = sshll.u32 [#allocation10], 4
          %s423 = int_to_ptr.vmem [resolvable:$true] %s422
          %428 = dma.hbm_to_vmem [thread:$0]  %s421, 256, %s423, [#allocation9], 128, 128, 8
        $region24: #{tpu_custom_call.1} parent=11 // pred_fallthru
          _
        // Predicated region
        $region25: #{tpu_custom_call.1} parent=11 // pred_check
          %p429 = pneg %p144
        $region26: #{tpu_custom_call.1} parent=11 // pred_check_branch
          %431 = sbr.rel (%p429) target = $region28
        $region27: #{tpu_custom_call.1} parent=11 // pred_region
          %s432 = smul.u32 2, %s37
          %s434 = ssub.s32 64, 64
          %435 = vsyncadd [#allocation12], %s434
          %s436 = smul.addr %s432, 32
          %s437 = scalar_lea.hbm %s3, %s436
          %s438 = sshll.u32 [#allocation11], 4
          %s439 = int_to_ptr.vmem [resolvable:$true] %s438
          %444 = dma.hbm_to_vmem [thread:$0]  %s437, 64, %s439, [#allocation12], 32, 32, 2
        $region28: #{tpu_custom_call.1} parent=11 // pred_fallthru
          _
        // Predicated region
        $region29: #{tpu_custom_call.1} parent=11 // pred_check
          %p445 = pneg %p165
        $region30: #{tpu_custom_call.1} parent=11 // pred_check_branch
          %447 = sbr.rel (%p445) target = $region32
        $region31: #{tpu_custom_call.1} parent=11 // pred_region
          %s449 = ssub.s32 256, 256
          %450 = vsyncadd [#allocation12], %s449
          %s451 = sshll.u32 [#allocation13], 4
          %s452 = int_to_ptr.vmem [resolvable:$true] %s451
          %457 = dma.hbm_to_vmem [thread:$0]  %s4, 256, %s452, [#allocation12], 128, 128, 8
        $region32: #{tpu_custom_call.1} parent=11 // pred_fallthru
          _
        // Predicated region
        $region33: #{tpu_custom_call.1} parent=11 // pred_check
          %p458 = pneg %p186
        $region34: #{tpu_custom_call.1} parent=11 // pred_check_branch
          %460 = sbr.rel (%p458) target = $region36
        $region35: #{tpu_custom_call.1} parent=11 // pred_region
          _
        $region36: #{tpu_custom_call.1} parent=11 // pred_fallthru
          _
        // Predicated region
        $region37: #{tpu_custom_call.1} parent=11 // pred_check
          %p461 = pneg %p207
        $region38: #{tpu_custom_call.1} parent=11 // pred_check_branch
          %463 = sbr.rel (%p461) target = $region40
        $region39: #{tpu_custom_call.1} parent=11 // pred_region
          _
        $region40: #{tpu_custom_call.1} parent=11 // pred_fallthru
          _
        // Predicated region
        $region41: #{tpu_custom_call.1} parent=11 // pred_check
          %p464 = pneg %p228
        $region42: #{tpu_custom_call.1} parent=11 // pred_check_branch
          %466 = sbr.rel (%p464) target = $region44
        $region43: #{tpu_custom_call.1} parent=11 // pred_region
          _
        $region44: #{tpu_custom_call.1} parent=11 // pred_fallthru
          _
        // Predicated region
        $region45: #{tpu_custom_call.1} parent=11 // pred_check
          %p467 = pneg %p249
        $region46: #{tpu_custom_call.1} parent=11 // pred_check_branch
          %469 = sbr.rel (%p467) target = $region48
        $region47: #{tpu_custom_call.1} parent=11 // pred_region
          %s471 = ssub.s32 256, 256
          %472 = vsyncadd [#allocation15], %s471
          %s473 = sshll.u32 [#allocation14], 4
          %s474 = int_to_ptr.vmem [resolvable:$true] %s473
          %479 = dma.hbm_to_vmem [thread:$0]  %s8, 256, %s474, [#allocation15], 128, 128, 8
        $region48: #{tpu_custom_call.1} parent=11 // pred_fallthru
          _
        // Predicated region
        $region49: #{tpu_custom_call.1} parent=11 // pred_check
          %p480 = pneg %p270
        $region50: #{tpu_custom_call.1} parent=11 // pred_check_branch
          %482 = sbr.rel (%p480) target = $region52
        $region51: #{tpu_custom_call.1} parent=11 // pred_region
          %s484 = ssub.s32 16, 16
          %485 = vsyncadd [#allocation15], %s484
          %s487 = sshll.u32 [#allocation16], 4
          %s488 = int_to_ptr.vmem [resolvable:$true] %s487
          %490 = dma.hbm_to_vmem [thread:$0]  %s9, 16, %s488, [#allocation15]
        $region52: #{tpu_custom_call.1} parent=11 // pred_fallthru
          _
        // Predicated region
        $region53: #{tpu_custom_call.1} parent=11 // pred_check
          %p491 = pneg %p291
        $region54: #{tpu_custom_call.1} parent=11 // pred_check_branch
          %493 = sbr.rel (%p491) target = $region56
        $region55: #{tpu_custom_call.1} parent=11 // pred_region
          _
        $region56: #{tpu_custom_call.1} parent=11 // pred_fallthru
          _
        // Predicated region
        $region57: #{tpu_custom_call.1} parent=11 // pred_check
          %p494 = pneg %p312
        $region58: #{tpu_custom_call.1} parent=11 // pred_check_branch
          %496 = sbr.rel (%p494) target = $region60
        $region59: #{tpu_custom_call.1} parent=11 // pred_region
          _
        $region60: #{tpu_custom_call.1} parent=11 // pred_fallthru
          _
      $region12: #{tpu_custom_call.1} parent=5 // pred_fallthru
        _
      %p497 = scmp.lt.s32.totalorder %s28, 2
      // Predicated region
      $region61: #{tpu_custom_call.1} parent=5 // pred_check
        %p498 = pneg %p497
      $region62: #{tpu_custom_call.1} parent=5 // pred_check_branch
        %500 = sbr.rel (%p498) target = $region64
      $region63: #{tpu_custom_call.1} parent=5 // pred_region
        _
      $region64: #{tpu_custom_call.1} parent=5 // pred_fallthru
        _
      %p501 = scmp.le.s32.totalorder 1, %s28
      %p502 = scmp.lt.s32.totalorder %s28, 3
      %p503 = pnand %p501, %p502
      %p504 = pneg %p503
      // Predicated region
      $region65: #{tpu_custom_call.1} parent=5 // pred_check
        _
      $region66: #{tpu_custom_call.1} parent=5 // pred_check_branch
        %506 = sbr.rel (%p503) target = $region68
      $region67: #{tpu_custom_call.1} parent=5 // pred_region
        %s507 = ssub.s32 %s28, 1
        // Predicated region
        $region69: #{tpu_custom_call.1} parent=67 // pred_check
          %p508 = pneg %p66
        $region70: #{tpu_custom_call.1} parent=67 // pred_check_branch
          %510 = sbr.rel (%p508) target = $region72
        $region71: #{tpu_custom_call.1} parent=67 // pred_region
          %511 = dma.done [#allocation6], 256
        $region72: #{tpu_custom_call.1} parent=67 // pred_fallthru
          _
        // Predicated region
        $region73: #{tpu_custom_call.1} parent=67 // pred_check
          %p512 = pneg %p92
        $region74: #{tpu_custom_call.1} parent=67 // pred_check_branch
          %514 = sbr.rel (%p512) target = $region76
        $region75: #{tpu_custom_call.1} parent=67 // pred_region
          %515 = dma.done [#allocation9], 256
        $region76: #{tpu_custom_call.1} parent=67 // pred_fallthru
          _
        // Predicated region
        $region77: #{tpu_custom_call.1} parent=67 // pred_check
          %p516 = pneg %p118
        $region78: #{tpu_custom_call.1} parent=67 // pred_check_branch
          %518 = sbr.rel (%p516) target = $region80
        $region79: #{tpu_custom_call.1} parent=67 // pred_region
          %519 = dma.done [#allocation9], 256
        $region80: #{tpu_custom_call.1} parent=67 // pred_fallthru
          _
        // Predicated region
        $region81: #{tpu_custom_call.1} parent=67 // pred_check
          %p520 = pneg %p144
        $region82: #{tpu_custom_call.1} parent=67 // pred_check_branch
          %522 = sbr.rel (%p520) target = $region84
        $region83: #{tpu_custom_call.1} parent=67 // pred_region
          %523 = dma.done [#allocation12], 64
        $region84: #{tpu_custom_call.1} parent=67 // pred_fallthru
          _
        // Predicated region
        $region85: #{tpu_custom_call.1} parent=67 // pred_check
          %p524 = pneg %p165
        $region86: #{tpu_custom_call.1} parent=67 // pred_check_branch
          %526 = sbr.rel (%p524) target = $region88
        $region87: #{tpu_custom_call.1} parent=67 // pred_region
          %527 = dma.done [#allocation12], 256
        $region88: #{tpu_custom_call.1} parent=67 // pred_fallthru
          _
        // Predicated region
        $region89: #{tpu_custom_call.1} parent=67 // pred_check
          %p528 = pneg %p249
        $region90: #{tpu_custom_call.1} parent=67 // pred_check_branch
          %530 = sbr.rel (%p528) target = $region92
        $region91: #{tpu_custom_call.1} parent=67 // pred_region
          %531 = dma.done [#allocation15], 256
        $region92: #{tpu_custom_call.1} parent=67 // pred_fallthru
          _
        // Predicated region
        $region93: #{tpu_custom_call.1} parent=67 // pred_check
          %p532 = pneg %p270
        $region94: #{tpu_custom_call.1} parent=67 // pred_check_branch
          %534 = sbr.rel (%p532) target = $region96
        $region95: #{tpu_custom_call.1} parent=67 // pred_region
          %535 = dma.done [#allocation15], 16
        $region96: #{tpu_custom_call.1} parent=67 // pred_fallthru
          _
        %p536 = pneg %p66
        %p537 = pneg %p63
        %p538 = pneg %p92
        %p539 = pneg %p89
        %p540 = pneg %p118
        %p541 = pneg %p115
        %p542 = pneg %p144
        %p543 = pneg %p141
        %p544 = pneg %p165
        %p545 = pneg %p162
        %p546 = pneg %p186
        %p547 = pneg %p183
        %p548 = pneg %p207
        %p549 = pneg %p204
        %p550 = pneg %p228
        %p551 = pneg %p225
        %p552 = pneg %p249
        %p553 = pneg %p246
        %p554 = pneg %p270
        %p555 = pneg %p267
        %p556 = pneg %p291
        %p557 = pneg %p288
        %p558 = pneg %p312
        %p559 = pneg %p309
        %p560 = pneg %p338
        %p561 = pneg %p335
        %p562 = pneg %p366
        %p563 = pneg %p363
        %s564 = sand.u32 %s353, 1
        %s565 = scalar_lea.sflag [#allocation19], %s564
        %s566 = sand.u32 %s353, 1
        %s567 = smul.addr %s566, 16
        %s568 = scalar_lea.vmem [#allocation18], %s567
        %s569 = smul.u32 2, %s37
        %s570 = smul.u32 2, %s37
        %s571 = smul.u32 2, %s37
        %s572 = smul.u32 2, %s37
        %s573 = smul.u32 2, %s37
        %s574 = smul.u32 2, %s37
        %p577 = scmp.eq.s32.totalorder %s38, 0
        // Predicated region
        $region97: #{tpu_custom_call.1} parent=67 // pred_check
          %p578 = pneg %p577
        $region98: #{tpu_custom_call.1} parent=67 // pred_check_branch
          %580 = sbr.rel (%p578) target = $region100
        $region99: #{tpu_custom_call.1} parent=67 // pred_region
          %v581 = vld [vmem:[#allocation5] sm:$0xff]
          %v582 = vld [vmem:[#allocation5 + $0x8] sm:$0xff]
          %v583 = vld [vmem:[#allocation13] sm:$0xff]
          %v584 = vld [vmem:[#allocation13 + $0x8] sm:$0xff]
          %v585 = vld [vmem:[%s5] sm:$0x1]
          %v587 = vlaneseq
          %v588 = vshrl.u32 %v587, 7
          %v589 = vsub.s32 0, %v588
          %v590 = vrot.slane %v585, %v589
          %vm592 = vcmask 130048
          %v594 = vsel %vm592, %v581, 0
          %v597 = vsel %vm592, %v582, 0
          %599 = vmatprep.subr.mxu0 0.0
          %600 = vmatpush1.msra.mxu0 %v583
          %601 = vmatprep.subr.mxu0 0.0
          %602 = vmatpush1.msra.mxu0 %v584
          %603 = vmatprep.subr.mxu0 0.0
          %604 = vmatpush1.msra.mxu0 0.0
          %605 = vmatprep.subr.mxu0 0.0
          %606 = vmatpush1.msra.mxu0 0.0
          %607 = vmatprep.subr.mxu0 0.0
          %608 = vmatpush1.msra.mxu0 0.0
          %609 = vmatprep.subr.mxu0 0.0
          %610 = vmatpush1.msra.mxu0 0.0
          %611 = vmatprep.subr.mxu0 0.0
          %612 = vmatpush1.msra.mxu0 0.0
          %613 = vmatprep.subr.mxu0 0.0
          %614 = vmatpush1.msra.mxu0 0.0
          %615 = vmatprep.subr.mxu0 0.0
          %616 = vmatpush1.msra.mxu0 0.0
          %617 = vmatprep.subr.mxu0 0.0
          %618 = vmatpush1.msra.mxu0 0.0
          %619 = vmatprep.subr.mxu0 0.0
          %620 = vmatpush1.msra.mxu0 0.0
          %621 = vmatprep.subr.mxu0 0.0
          %622 = vmatpush1.msra.mxu0 0.0
          %623 = vmatprep.subr.mxu0 0.0
          %624 = vmatpush1.msra.mxu0 0.0
          %625 = vmatprep.subr.mxu0 0.0
          %626 = vmatpush1.msra.mxu0 0.0
          %627 = vmatprep.subr.mxu0 0.0
          %628 = vmatpush1.msra.mxu0 0.0
          %629 = vmatprep.subr.mxu0 0.0
          %630 = vmatpush1.msra.mxu0 0.0
          %631 = vmatprep.subr.mxu0 0.0
          %632 = vmatpush1.msra.mxu0 0.0
          %633 = vmatprep.subr.mxu0 0.0
          %634 = vmatpush1.msra.mxu0 0.0
          %635 = vmatprep.subr.mxu0 0.0
          %636 = vmatpush1.msra.mxu0 0.0
          %637 = vmatprep.subr.mxu0 0.0
          %638 = vmatpush1.msra.mxu0 0.0
          %639 = vmatprep.subr.mxu0 0.0
          %640 = vmatpush1.msra.mxu0 0.0
          %641 = vmatprep.subr.mxu0 0.0
          %642 = vmatpush1.msra.mxu0 0.0
          %643 = vmatprep.subr.mxu0 0.0
          %644 = vmatpush1.msra.mxu0 0.0
          %645 = vmatprep.subr.mxu0 0.0
          %646 = vmatpush1.msra.mxu0 0.0
          %647 = vmatprep.subr.mxu0 0.0
          %648 = vmatpush1.msra.mxu0 0.0
          %649 = vmatprep.subr.mxu0 0.0
          %650 = vmatpush1.msra.mxu0 0.0
          %651 = vmatprep.subr.mxu0 0.0
          %652 = vmatpush1.msra.mxu0 0.0
          %653 = vmatprep.subr.mxu0 0.0
          %654 = vmatpush1.msra.mxu0 0.0
          %655 = vmatprep.subr.mxu0 0.0
          %656 = vmatpush1.msra.mxu0 0.0
          %657 = vmatprep.subr.mxu0 0.0
          %658 = vmatpush1.msra.mxu0 0.0
          %659 = vmatprep.subr.mxu0 0.0
          %660 = vmatpush1.msra.mxu0 0.0
          %661 = vmatprep.subr.mxu0 0.0
          %662 = vmatpush1.msra.mxu0 0.0
          %663 = vmatprep.mubr.f32.mxu0 0.0
          %664 = vmatmul.mubr.f32.gmra.mrb[0].mxu0 %v594
          %v665 = vpop.f32.mrb[0].mxu0
          %v666 = vadd.f32 %v590, %v665
          %v667 = vpop.f32.mrb[0].mxu0
          %668 = vmatprep.mubr.f32.mxu0 0.0
          %669 = vmatmul.mubr.f32.gmra.mrb[0].mxu0 %v597
          %v670 = vpop.f32.mrb[0].mxu0
          %v671 = vadd.f32 %v590, %v670
          %v672 = vpop.f32.mrb[0].mxu0
          %673 = vdwg.mxu0
          %v674 = vmul.f32 %v666, 0.35355338
          %v675 = vmul.f32 %v671, 0.35355338
          %v676 = vld [vmem:[#allocation8] sm:$0xff]
          %v677 = vld [vmem:[#allocation8 + $0x8] sm:$0xff]
          %v678 = vld [vmem:[%s6] sm:$0xff]
          %v679 = vld [vmem:[%s6 + $0x8] sm:$0xff]
          %v680 = vld [vmem:[%s7] sm:$0x1]
          %v682 = vlaneseq
          %v683 = vshrl.u32 %v682, 7
          %v684 = vsub.s32 0, %v683
          %v685 = vrot.slane %v680, %v684
          %v688 = vsel %vm592, %v676, 0
          %v691 = vsel %vm592, %v677, 0
          %693 = vmatprep.subr.mxu0 0.0
          %694 = vmatpush1.msra.mxu0 %v678
          %695 = vmatprep.subr.mxu0 0.0
          %696 = vmatpush1.msra.mxu0 %v679
          %697 = vmatprep.subr.mxu0 0.0
          %698 = vmatpush1.msra.mxu0 0.0
          %699 = vmatprep.subr.mxu0 0.0
          %700 = vmatpush1.msra.mxu0 0.0
          %701 = vmatprep.subr.mxu0 0.0
          %702 = vmatpush1.msra.mxu0 0.0
          %703 = vmatprep.subr.mxu0 0.0
          %704 = vmatpush1.msra.mxu0 0.0
          %705 = vmatprep.subr.mxu0 0.0
          %706 = vmatpush1.msra.mxu0 0.0
          %707 = vmatprep.subr.mxu0 0.0
          %708 = vmatpush1.msra.mxu0 0.0
          %709 = vmatprep.subr.mxu0 0.0
          %710 = vmatpush1.msra.mxu0 0.0
          %711 = vmatprep.subr.mxu0 0.0
          %712 = vmatpush1.msra.mxu0 0.0
          %713 = vmatprep.subr.mxu0 0.0
          %714 = vmatpush1.msra.mxu0 0.0
          %715 = vmatprep.subr.mxu0 0.0
          %716 = vmatpush1.msra.mxu0 0.0
          %717 = vmatprep.subr.mxu0 0.0
          %718 = vmatpush1.msra.mxu0 0.0
          %719 = vmatprep.subr.mxu0 0.0
          %720 = vmatpush1.msra.mxu0 0.0
          %721 = vmatprep.subr.mxu0 0.0
          %722 = vmatpush1.msra.mxu0 0.0
          %723 = vmatprep.subr.mxu0 0.0
          %724 = vmatpush1.msra.mxu0 0.0
          %725 = vmatprep.subr.mxu0 0.0
          %726 = vmatpush1.msra.mxu0 0.0
          %727 = vmatprep.subr.mxu0 0.0
          %728 = vmatpush1.msra.mxu0 0.0
          %729 = vmatprep.subr.mxu0 0.0
          %730 = vmatpush1.msra.mxu0 0.0
          %731 = vmatprep.subr.mxu0 0.0
          %732 = vmatpush1.msra.mxu0 0.0
          %733 = vmatprep.subr.mxu0 0.0
          %734 = vmatpush1.msra.mxu0 0.0
          %735 = vmatprep.subr.mxu0 0.0
          %736 = vmatpush1.msra.mxu0 0.0
          %737 = vmatprep.subr.mxu0 0.0
          %738 = vmatpush1.msra.mxu0 0.0
          %739 = vmatprep.subr.mxu0 0.0
          %740 = vmatpush1.msra.mxu0 0.0
          %741 = vmatprep.subr.mxu0 0.0
          %742 = vmatpush1.msra.mxu0 0.0
          %743 = vmatprep.subr.mxu0 0.0
          %744 = vmatpush1.msra.mxu0 0.0
          %745 = vmatprep.subr.mxu0 0.0
          %746 = vmatpush1.msra.mxu0 0.0
          %747 = vmatprep.subr.mxu0 0.0
          %748 = vmatpush1.msra.mxu0 0.0
          %749 = vmatprep.subr.mxu0 0.0
          %750 = vmatpush1.msra.mxu0 0.0
          %751 = vmatprep.subr.mxu0 0.0
          %752 = vmatpush1.msra.mxu0 0.0
          %753 = vmatprep.subr.mxu0 0.0
          %754 = vmatpush1.msra.mxu0 0.0
          %755 = vmatprep.subr.mxu0 0.0
          %756 = vmatpush1.msra.mxu0 0.0
          %757 = vmatprep.mubr.f32.mxu0 0.0
          %758 = vmatmul.mubr.f32.gmra.mrb[0].mxu0 %v688
          %v759 = vpop.f32.mrb[0].mxu0
          %v760 = vadd.f32 %v685, %v759
          %v761 = vpop.f32.mrb[0].mxu0
          %762 = vmatprep.mubr.f32.mxu0 0.0
          %763 = vmatmul.mubr.f32.gmra.mrb[0].mxu0 %v691
          %v764 = vpop.f32.mrb[0].mxu0
          %v765 = vadd.f32 %v685, %v764
          %v766 = vpop.f32.mrb[0].mxu0
          %767 = vdwg.mxu0
          %v768 = vld [vmem:[#allocation10] sm:$0xff]
          %v769 = vld [vmem:[#allocation10 + $0x8] sm:$0xff]
          %v770 = vld [vmem:[#allocation14] sm:$0xff]
          %v771 = vld [vmem:[#allocation14 + $0x8] sm:$0xff]
          %v772 = vld [vmem:[#allocation16] sm:$0x1]
          %v774 = vlaneseq
          %v775 = vshrl.u32 %v774, 7
          %v776 = vsub.s32 0, %v775
          %v777 = vrot.slane %v772, %v776
          %v780 = vsel %vm592, %v768, 0
          %v783 = vsel %vm592, %v769, 0
          %785 = vmatprep.subr.mxu0 0.0
          %786 = vmatpush1.msra.mxu0 %v770
          %787 = vmatprep.subr.mxu0 0.0
          %788 = vmatpush1.msra.mxu0 %v771
          %789 = vmatprep.subr.mxu0 0.0
          %790 = vmatpush1.msra.mxu0 0.0
          %791 = vmatprep.subr.mxu0 0.0
          %792 = vmatpush1.msra.mxu0 0.0
          %793 = vmatprep.subr.mxu0 0.0
          %794 = vmatpush1.msra.mxu0 0.0
          %795 = vmatprep.subr.mxu0 0.0
          %796 = vmatpush1.msra.mxu0 0.0
          %797 = vmatprep.subr.mxu0 0.0
          %798 = vmatpush1.msra.mxu0 0.0
          %799 = vmatprep.subr.mxu0 0.0
          %800 = vmatpush1.msra.mxu0 0.0
          %801 = vmatprep.subr.mxu0 0.0
          %802 = vmatpush1.msra.mxu0 0.0
          %803 = vmatprep.subr.mxu0 0.0
          %804 = vmatpush1.msra.mxu0 0.0
          %805 = vmatprep.subr.mxu0 0.0
          %806 = vmatpush1.msra.mxu0 0.0
          %807 = vmatprep.subr.mxu0 0.0
          %808 = vmatpush1.msra.mxu0 0.0
          %809 = vmatprep.subr.mxu0 0.0
          %810 = vmatpush1.msra.mxu0 0.0
          %811 = vmatprep.subr.mxu0 0.0
          %812 = vmatpush1.msra.mxu0 0.0
          %813 = vmatprep.subr.mxu0 0.0
          %814 = vmatpush1.msra.mxu0 0.0
          %815 = vmatprep.subr.mxu0 0.0
          %816 = vmatpush1.msra.mxu0 0.0
          %817 = vmatprep.subr.mxu0 0.0
          %818 = vmatpush1.msra.mxu0 0.0
          %819 = vmatprep.subr.mxu0 0.0
          %820 = vmatpush1.msra.mxu0 0.0
          %821 = vmatprep.subr.mxu0 0.0
          %822 = vmatpush1.msra.mxu0 0.0
          %823 = vmatprep.subr.mxu0 0.0
          %824 = vmatpush1.msra.mxu0 0.0
          %825 = vmatprep.subr.mxu0 0.0
          %826 = vmatpush1.msra.mxu0 0.0
          %827 = vmatprep.subr.mxu0 0.0
          %828 = vmatpush1.msra.mxu0 0.0
          %829 = vmatprep.subr.mxu0 0.0
          %830 = vmatpush1.msra.mxu0 0.0
          %831 = vmatprep.subr.mxu0 0.0
          %832 = vmatpush1.msra.mxu0 0.0
          %833 = vmatprep.subr.mxu0 0.0
          %834 = vmatpush1.msra.mxu0 0.0
          %835 = vmatprep.subr.mxu0 0.0
          %836 = vmatpush1.msra.mxu0 0.0
          %837 = vmatprep.subr.mxu0 0.0
          %838 = vmatpush1.msra.mxu0 0.0
          %839 = vmatprep.subr.mxu0 0.0
          %840 = vmatpush1.msra.mxu0 0.0
          %841 = vmatprep.subr.mxu0 0.0
          %842 = vmatpush1.msra.mxu0 0.0
          %843 = vmatprep.subr.mxu0 0.0
          %844 = vmatpush1.msra.mxu0 0.0
          %845 = vmatprep.subr.mxu0 0.0
          %846 = vmatpush1.msra.mxu0 0.0
          %847 = vmatprep.subr.mxu0 0.0
          %848 = vmatpush1.msra.mxu0 0.0
          %849 = vmatprep.mubr.f32.mxu0 0.0
          %850 = vmatmul.mubr.f32.gmra.mrb[0].mxu0 %v780
          %v851 = vpop.f32.mrb[0].mxu0
          %v852 = vadd.f32 %v777, %v851
          %v853 = vpop.f32.mrb[0].mxu0
          %854 = vmatprep.mubr.f32.mxu0 0.0
          %855 = vmatmul.mubr.f32.gmra.mrb[0].mxu0 %v783
          %v856 = vpop.f32.mrb[0].mxu0
          %v857 = vadd.f32 %v777, %v856
          %v858 = vpop.f32.mrb[0].mxu0
          %859 = vdwg.mxu0
          %vm860 = vcmask 64512
          %861 = vst.msk [vmem:[#allocation2] sm:$0xff] %vm860, %v674
          %862 = vst.msk [vmem:[#allocation2 + $0x8] sm:$0xff] %vm860, %v675
          %863 = vst.msk [vmem:[#allocation3] sm:$0xff] %vm860, %v760
          %864 = vst.msk [vmem:[#allocation3 + $0x8] sm:$0xff] %vm860, %v765
          %865 = vst.msk [vmem:[#allocation4] sm:$0xff] %vm860, %v852
          %866 = vst.msk [vmem:[#allocation4 + $0x8] sm:$0xff] %vm860, %v857
          %869 = vrot.lane.b32.xlu0 %v674, 120
          %v870 = vpop.permute.xlu0 %869
          %871 = vrot.lane.b32.xlu0 %v675, 120
          %v872 = vpop.permute.xlu0 %871
          %s875 = scalar_lea.vmem [#allocation2], 16
          %876 = vst.msk [vmem:[%s875] sm:$0xff] %vm860, %v870
          %877 = vst.msk [vmem:[%s875 + $0x8] sm:$0xff] %vm860, %v872
          %880 = vrot.lane.b32.xlu0 %v760, 120
          %v881 = vpop.permute.xlu0 %880
          %882 = vrot.lane.b32.xlu0 %v765, 120
          %v883 = vpop.permute.xlu0 %882
          %s886 = scalar_lea.vmem [#allocation3], 16
          %887 = vst.msk [vmem:[%s886] sm:$0xff] %vm860, %v881
          %888 = vst.msk [vmem:[%s886 + $0x8] sm:$0xff] %vm860, %v883
          %891 = vrot.lane.b32.xlu0 %v852, 120
          %v892 = vpop.permute.xlu0 %891
          %893 = vrot.lane.b32.xlu0 %v857, 120
          %v894 = vpop.permute.xlu0 %893
          %s897 = scalar_lea.vmem [#allocation4], 16
          %898 = vst.msk [vmem:[%s897] sm:$0xff] %vm860, %v892
          %899 = vst.msk [vmem:[%s897 + $0x8] sm:$0xff] %vm860, %v894
          %v900 = vld [vmem:[%s11] sm:$0x1]
          %v902 = vlaneseq
          %v903 = vshrl.u32 %v902, 7
          %v904 = vsub.s32 0, %v903
          %v905 = vrot.slane %v900, %v904
          %vm907 = vcmask 261120
          %908 = vst.msk [vmem:[#allocation17] sm:$0xff] %vm907, %v905
          %909 = vst.msk [vmem:[#allocation17 + $0x8] sm:$0xff] %vm907, %v905
        $region100: #{tpu_custom_call.1} parent=67 // pred_fallthru
          _
        %s910 = smul.u32 %s38, 16
        %s911 = scalar_lea.vmem [#allocation2], %s910
        %v912 = vld [vmem:[%s911] sm:$0xff]
        %v913 = vld [vmem:[%s911 + $0x8] sm:$0xff]
        %s914 = scalar_lea.vmem [#allocation3], %s910
        %v915 = vld [vmem:[%s914] sm:$0xff]
        %v916 = vld [vmem:[%s914 + $0x8] sm:$0xff]
        %s917 = scalar_lea.vmem [#allocation4], %s910
        %v918 = vld [vmem:[%s917] sm:$0xff]
        %v919 = vld [vmem:[%s917 + $0x8] sm:$0xff]
        %vm920 = vcmask 64512
        %v922 = vsel %vm920, %v912, 0
        %v925 = vsel %vm920, %v915, 0
        %927 = vmatprep.subr.mxu0 0.0
        %928 = vmatpush1.xpose.msra.mxu0 %v925
        %929 = vmatprep.subr.mxu0 0.0
        %930 = vmatpush1.xpose.msra.mxu0 0.0
        %931 = vmatprep.subr.mxu0 0.0
        %932 = vmatpush1.xpose.msra.mxu0 0.0
        %933 = vmatprep.subr.mxu0 0.0
        %934 = vmatpush1.xpose.msra.mxu0 0.0
        %935 = vmatprep.subr.mxu0 0.0
        %936 = vmatpush1.xpose.msra.mxu0 0.0
        %937 = vmatprep.subr.mxu0 0.0
        %938 = vmatpush1.xpose.msra.mxu0 0.0
        %939 = vmatprep.subr.mxu0 0.0
        %940 = vmatpush1.xpose.msra.mxu0 0.0
        %941 = vmatprep.subr.mxu0 0.0
        %942 = vmatpush1.xpose.msra.mxu0 0.0
        %943 = vmatprep.subr.mxu0 0.0
        %944 = vmatpush1.xpose.msra.mxu0 0.0
        %945 = vmatprep.subr.mxu0 0.0
        %946 = vmatpush1.xpose.msra.mxu0 0.0
        %947 = vmatprep.subr.mxu0 0.0
        %948 = vmatpush1.xpose.msra.mxu0 0.0
        %949 = vmatprep.subr.mxu0 0.0
        %950 = vmatpush1.xpose.msra.mxu0 0.0
        %951 = vmatprep.subr.mxu0 0.0
        %952 = vmatpush1.xpose.msra.mxu0 0.0
        %953 = vmatprep.subr.mxu0 0.0
        %954 = vmatpush1.xpose.msra.mxu0 0.0
        %955 = vmatprep.subr.mxu0 0.0
        %956 = vmatpush1.xpose.msra.mxu0 0.0
        %957 = vmatprep.subr.mxu0 0.0
        %958 = vmatpush1.xpose.msra.mxu0 0.0
        %959 = vmatprep.subr.mxu0 0.0
        %960 = vmatpush1.xpose.msra.mxu0 0.0
        %961 = vmatprep.subr.mxu0 0.0
        %962 = vmatpush1.xpose.msra.mxu0 0.0
        %963 = vmatprep.subr.mxu0 0.0
        %964 = vmatpush1.xpose.msra.mxu0 0.0
        %965 = vmatprep.subr.mxu0 0.0
        %966 = vmatpush1.xpose.msra.mxu0 0.0
        %967 = vmatprep.subr.mxu0 0.0
        %968 = vmatpush1.xpose.msra.mxu0 0.0
        %969 = vmatprep.subr.mxu0 0.0
        %970 = vmatpush1.xpose.msra.mxu0 0.0
        %971 = vmatprep.subr.mxu0 0.0
        %972 = vmatpush1.xpose.msra.mxu0 0.0
        %973 = vmatprep.subr.mxu0 0.0
        %974 = vmatpush1.xpose.msra.mxu0 0.0
        %975 = vmatprep.subr.mxu0 0.0
        %976 = vmatpush1.xpose.msra.mxu0 0.0
        %977 = vmatprep.subr.mxu0 0.0
        %978 = vmatpush1.xpose.msra.mxu0 0.0
        %979 = vmatprep.subr.mxu0 0.0
        %980 = vmatpush1.xpose.msra.mxu0 0.0
        %981 = vmatprep.subr.mxu0 0.0
        %982 = vmatpush1.xpose.msra.mxu0 0.0
        %983 = vmatprep.subr.mxu0 0.0
        %984 = vmatpush1.xpose.msra.mxu0 0.0
        %985 = vmatprep.subr.mxu0 0.0
        %986 = vmatpush1.xpose.msra.mxu0 0.0
        %987 = vmatprep.subr.mxu0 0.0
        %988 = vmatpush1.xpose.msra.mxu0 0.0
        %989 = vmatprep.subr.mxu0 0.0
        %990 = vmatpush1.xpose.msra.mxu0 0.0
        %991 = vmatprep.mubr.f32.mxu0 0.0
        %992 = vmatmul.mubr.f32.gmra.mrb[0].mxu0 %v922
        %v993 = vpop.f32.mrb[0].mxu0
        %v994 = vadd.f32 0.0, %v993
        %v995 = vpop.f32.mrb[0].mxu0
        %996 = vdwg.mxu0
        %v998 = vsel %vm920, %v913, 0
        %v1001 = vsel %vm920, %v916, 0
        %1003 = vmatprep.subr.mxu0 0.0
        %1004 = vmatpush1.xpose.msra.mxu0 %v1001
        %1005 = vmatprep.subr.mxu0 0.0
        %1006 = vmatpush1.xpose.msra.mxu0 0.0
        %1007 = vmatprep.subr.mxu0 0.0
        %1008 = vmatpush1.xpose.msra.mxu0 0.0
        %1009 = vmatprep.subr.mxu0 0.0
        %1010 = vmatpush1.xpose.msra.mxu0 0.0
        %1011 = vmatprep.subr.mxu0 0.0
        %1012 = vmatpush1.xpose.msra.mxu0 0.0
        %1013 = vmatprep.subr.mxu0 0.0
        %1014 = vmatpush1.xpose.msra.mxu0 0.0
        %1015 = vmatprep.subr.mxu0 0.0
        %1016 = vmatpush1.xpose.msra.mxu0 0.0
        %1017 = vmatprep.subr.mxu0 0.0
        %1018 = vmatpush1.xpose.msra.mxu0 0.0
        %1019 = vmatprep.subr.mxu0 0.0
        %1020 = vmatpush1.xpose.msra.mxu0 0.0
        %1021 = vmatprep.subr.mxu0 0.0
        %1022 = vmatpush1.xpose.msra.mxu0 0.0
        %1023 = vmatprep.subr.mxu0 0.0
        %1024 = vmatpush1.xpose.msra.mxu0 0.0
        %1025 = vmatprep.subr.mxu0 0.0
        %1026 = vmatpush1.xpose.msra.mxu0 0.0
        %1027 = vmatprep.subr.mxu0 0.0
        %1028 = vmatpush1.xpose.msra.mxu0 0.0
        %1029 = vmatprep.subr.mxu0 0.0
        %1030 = vmatpush1.xpose.msra.mxu0 0.0
        %1031 = vmatprep.subr.mxu0 0.0
        %1032 = vmatpush1.xpose.msra.mxu0 0.0
        %1033 = vmatprep.subr.mxu0 0.0
        %1034 = vmatpush1.xpose.msra.mxu0 0.0
        %1035 = vmatprep.subr.mxu0 0.0
        %1036 = vmatpush1.xpose.msra.mxu0 0.0
        %1037 = vmatprep.subr.mxu0 0.0
        %1038 = vmatpush1.xpose.msra.mxu0 0.0
        %1039 = vmatprep.subr.mxu0 0.0
        %1040 = vmatpush1.xpose.msra.mxu0 0.0
        %1041 = vmatprep.subr.mxu0 0.0
        %1042 = vmatpush1.xpose.msra.mxu0 0.0
        %1043 = vmatprep.subr.mxu0 0.0
        %1044 = vmatpush1.xpose.msra.mxu0 0.0
        %1045 = vmatprep.subr.mxu0 0.0
        %1046 = vmatpush1.xpose.msra.mxu0 0.0
        %1047 = vmatprep.subr.mxu0 0.0
        %1048 = vmatpush1.xpose.msra.mxu0 0.0
        %1049 = vmatprep.subr.mxu0 0.0
        %1050 = vmatpush1.xpose.msra.mxu0 0.0
        %1051 = vmatprep.subr.mxu0 0.0
        %1052 = vmatpush1.xpose.msra.mxu0 0.0
        %1053 = vmatprep.subr.mxu0 0.0
        %1054 = vmatpush1.xpose.msra.mxu0 0.0
        %1055 = vmatprep.subr.mxu0 0.0
        %1056 = vmatpush1.xpose.msra.mxu0 0.0
        %1057 = vmatprep.subr.mxu0 0.0
        %1058 = vmatpush1.xpose.msra.mxu0 0.0
        %1059 = vmatprep.subr.mxu0 0.0
        %1060 = vmatpush1.xpose.msra.mxu0 0.0
        %1061 = vmatprep.subr.mxu0 0.0
        %1062 = vmatpush1.xpose.msra.mxu0 0.0
        %1063 = vmatprep.subr.mxu0 0.0
        %1064 = vmatpush1.xpose.msra.mxu0 0.0
        %1065 = vmatprep.subr.mxu0 0.0
        %1066 = vmatpush1.xpose.msra.mxu0 0.0
        %1067 = vmatprep.mubr.f32.mxu0 0.0
        %1068 = vmatmul.mubr.f32.gmra.mrb[0].mxu0 %v998
        %v1069 = vpop.f32.mrb[0].mxu0
        %v1070 = vadd.f32 0.0, %v1069
        %v1071 = vpop.f32.mrb[0].mxu0
        %1072 = vdwg.mxu0
        %v1073 = vld [vmem:[#allocation11] sm:$0x3]
        %v1074 = vld [vmem:[#allocation11 + $0x2] sm:$0x3]
        %vm1075 = vnez %v1073
        %vm1076 = vnez %v1074
        %v1077 = vsel %vm1075, 16843009, 0
        %v1078 = vsel %vm1076, 16843009, 0
        %v1079 = vunpack.c.0.s8 %v1077
        %v1080 = vunpack.c.0.s8 %v1078
        %vm1081 = vcmp.ne.s32.totalorder %v1079, 0
        %vm1082 = vcmp.ne.s32.totalorder %v1080, 0
        %v1083 = vsel %vm1081, -1e+30, %v994
        %v1084 = vsel %vm1082, -1e+30, %v1070
        %v1085 = vsel %vm920, %v1083, -inf
        %1086 = vmax.xlane.f32.xlu0 %v1085
        %v1087 = vpop.xlane.xlu0 %1086
        %v1088 = vsel %vm920, %v1084, -inf
        %1089 = vmax.xlane.f32.xlu0 %v1088
        %v1090 = vpop.xlane.xlu0 %1089
        %v1091 = vsub.f32 %v1083, %v1087
        %v1092 = vsub.f32 %v1084, %v1090
        %v1093 = vmul.f32 %v1091, 1.442695
        %v1094 = vpow.pop %v1093
        %v1095 = vmul.f32 %v1092, 1.442695
        %v1096 = vpow.pop %v1095
        %v1097 = vsel %vm920, %v1094, 0.0
        %1098 = vadd.xlane.f32.xlu0 %v1097
        %v1099 = vpop.xlane.xlu0 %1098
        %v1100 = vsel %vm920, %v1096, 0.0
        %1101 = vadd.xlane.f32.xlu0 %v1100
        %v1102 = vpop.xlane.xlu0 %1101
        %v1103 = vrcp.pop %v1099
        %v1104 = vmul.f32 %v1094, %v1103
        %v1105 = vrcp.pop %v1102
        %v1106 = vmul.f32 %v1096, %v1105
        %1107 = vst.msk [vmem:[%s568] sm:$0xff] %vm920, %v1104
        %1108 = vst.msk [vmem:[%s568 + $0x8] sm:$0xff] %vm920, %v1106
        %v1110 = vsel %vm920, %v1104, 0
        %1112 = vmatprep.subr.mxu0 0.0
        %1113 = vmatpush1.msra.mxu0 %v918
        %1114 = vmatprep.subr.mxu0 0.0
        %1115 = vmatpush1.msra.mxu0 0.0
        %1116 = vmatprep.subr.mxu0 0.0
        %1117 = vmatpush1.msra.mxu0 0.0
        %1118 = vmatprep.subr.mxu0 0.0
        %1119 = vmatpush1.msra.mxu0 0.0
        %1120 = vmatprep.subr.mxu0 0.0
        %1121 = vmatpush1.msra.mxu0 0.0
        %1122 = vmatprep.subr.mxu0 0.0
        %1123 = vmatpush1.msra.mxu0 0.0
        %1124 = vmatprep.subr.mxu0 0.0
        %1125 = vmatpush1.msra.mxu0 0.0
        %1126 = vmatprep.subr.mxu0 0.0
        %1127 = vmatpush1.msra.mxu0 0.0
        %1128 = vmatprep.subr.mxu0 0.0
        %1129 = vmatpush1.msra.mxu0 0.0
        %1130 = vmatprep.subr.mxu0 0.0
        %1131 = vmatpush1.msra.mxu0 0.0
        %1132 = vmatprep.subr.mxu0 0.0
        %1133 = vmatpush1.msra.mxu0 0.0
        %1134 = vmatprep.subr.mxu0 0.0
        %1135 = vmatpush1.msra.mxu0 0.0
        %1136 = vmatprep.subr.mxu0 0.0
        %1137 = vmatpush1.msra.mxu0 0.0
        %1138 = vmatprep.subr.mxu0 0.0
        %1139 = vmatpush1.msra.mxu0 0.0
        %1140 = vmatprep.subr.mxu0 0.0
        %1141 = vmatpush1.msra.mxu0 0.0
        %1142 = vmatprep.subr.mxu0 0.0
        %1143 = vmatpush1.msra.mxu0 0.0
        %1144 = vmatprep.subr.mxu0 0.0
        %1145 = vmatpush1.msra.mxu0 0.0
        %1146 = vmatprep.subr.mxu0 0.0
        %1147 = vmatpush1.msra.mxu0 0.0
        %1148 = vmatprep.subr.mxu0 0.0
        %1149 = vmatpush1.msra.mxu0 0.0
        %1150 = vmatprep.subr.mxu0 0.0
        %1151 = vmatpush1.msra.mxu0 0.0
        %1152 = vmatprep.subr.mxu0 0.0
        %1153 = vmatpush1.msra.mxu0 0.0
        %1154 = vmatprep.subr.mxu0 0.0
        %1155 = vmatpush1.msra.mxu0 0.0
        %1156 = vmatprep.subr.mxu0 0.0
        %1157 = vmatpush1.msra.mxu0 0.0
        %1158 = vmatprep.subr.mxu0 0.0
        %1159 = vmatpush1.msra.mxu0 0.0
        %1160 = vmatprep.subr.mxu0 0.0
        %1161 = vmatpush1.msra.mxu0 0.0
        %1162 = vmatprep.subr.mxu0 0.0
        %1163 = vmatpush1.msra.mxu0 0.0
        %1164 = vmatprep.subr.mxu0 0.0
        %1165 = vmatpush1.msra.mxu0 0.0
        %1166 = vmatprep.subr.mxu0 0.0
        %1167 = vmatpush1.msra.mxu0 0.0
        %1168 = vmatprep.subr.mxu0 0.0
        %1169 = vmatpush1.msra.mxu0 0.0
        %1170 = vmatprep.subr.mxu0 0.0
        %1171 = vmatpush1.msra.mxu0 0.0
        %1172 = vmatprep.subr.mxu0 0.0
        %1173 = vmatpush1.msra.mxu0 0.0
        %1174 = vmatprep.subr.mxu0 0.0
        %1175 = vmatpush1.msra.mxu0 0.0
        %1176 = vmatprep.mubr.f32.mxu0 0.0
        %1177 = vmatmul.mubr.f32.gmra.mrb[0].mxu0 %v1110
        %v1178 = vpop.f32.mrb[0].mxu0
        %v1179 = vadd.f32 0.0, %v1178
        %v1180 = vpop.f32.mrb[0].mxu0
        %1181 = vdwg.mxu0
        %v1183 = vsel %vm920, %v1106, 0
        %1185 = vmatprep.subr.mxu0 0.0
        %1186 = vmatpush1.msra.mxu0 %v919
        %1187 = vmatprep.subr.mxu0 0.0
        %1188 = vmatpush1.msra.mxu0 0.0
        %1189 = vmatprep.subr.mxu0 0.0
        %1190 = vmatpush1.msra.mxu0 0.0
        %1191 = vmatprep.subr.mxu0 0.0
        %1192 = vmatpush1.msra.mxu0 0.0
        %1193 = vmatprep.subr.mxu0 0.0
        %1194 = vmatpush1.msra.mxu0 0.0
        %1195 = vmatprep.subr.mxu0 0.0
        %1196 = vmatpush1.msra.mxu0 0.0
        %1197 = vmatprep.subr.mxu0 0.0
        %1198 = vmatpush1.msra.mxu0 0.0
        %1199 = vmatprep.subr.mxu0 0.0
        %1200 = vmatpush1.msra.mxu0 0.0
        %1201 = vmatprep.subr.mxu0 0.0
        %1202 = vmatpush1.msra.mxu0 0.0
        %1203 = vmatprep.subr.mxu0 0.0
        %1204 = vmatpush1.msra.mxu0 0.0
        %1205 = vmatprep.subr.mxu0 0.0
        %1206 = vmatpush1.msra.mxu0 0.0
        %1207 = vmatprep.subr.mxu0 0.0
        %1208 = vmatpush1.msra.mxu0 0.0
        %1209 = vmatprep.subr.mxu0 0.0
        %1210 = vmatpush1.msra.mxu0 0.0
        %1211 = vmatprep.subr.mxu0 0.0
        %1212 = vmatpush1.msra.mxu0 0.0
        %1213 = vmatprep.subr.mxu0 0.0
        %1214 = vmatpush1.msra.mxu0 0.0
        %1215 = vmatprep.subr.mxu0 0.0
        %1216 = vmatpush1.msra.mxu0 0.0
        %1217 = vmatprep.subr.mxu0 0.0
        %1218 = vmatpush1.msra.mxu0 0.0
        %1219 = vmatprep.subr.mxu0 0.0
        %1220 = vmatpush1.msra.mxu0 0.0
        %1221 = vmatprep.subr.mxu0 0.0
        %1222 = vmatpush1.msra.mxu0 0.0
        %1223 = vmatprep.subr.mxu0 0.0
        %1224 = vmatpush1.msra.mxu0 0.0
        %1225 = vmatprep.subr.mxu0 0.0
        %1226 = vmatpush1.msra.mxu0 0.0
        %1227 = vmatprep.subr.mxu0 0.0
        %1228 = vmatpush1.msra.mxu0 0.0
        %1229 = vmatprep.subr.mxu0 0.0
        %1230 = vmatpush1.msra.mxu0 0.0
        %1231 = vmatprep.subr.mxu0 0.0
        %1232 = vmatpush1.msra.mxu0 0.0
        %1233 = vmatprep.subr.mxu0 0.0
        %1234 = vmatpush1.msra.mxu0 0.0
        %1235 = vmatprep.subr.mxu0 0.0
        %1236 = vmatpush1.msra.mxu0 0.0
        %1237 = vmatprep.subr.mxu0 0.0
        %1238 = vmatpush1.msra.mxu0 0.0
        %1239 = vmatprep.subr.mxu0 0.0
        %1240 = vmatpush1.msra.mxu0 0.0
        %1241 = vmatprep.subr.mxu0 0.0
        %1242 = vmatpush1.msra.mxu0 0.0
        %1243 = vmatprep.subr.mxu0 0.0
        %1244 = vmatpush1.msra.mxu0 0.0
        %1245 = vmatprep.subr.mxu0 0.0
        %1246 = vmatpush1.msra.mxu0 0.0
        %1247 = vmatprep.subr.mxu0 0.0
        %1248 = vmatpush1.msra.mxu0 0.0
        %1249 = vmatprep.mubr.f32.mxu0 0.0
        %1250 = vmatmul.mubr.f32.gmra.mrb[0].mxu0 %v1183
        %v1251 = vpop.f32.mrb[0].mxu0
        %v1252 = vadd.f32 0.0, %v1251
        %v1253 = vpop.f32.mrb[0].mxu0
        %1254 = vdwg.mxu0
        %v1255 = vld [vmem:[#allocation17] sm:$0xff]
        %v1256 = vld [vmem:[#allocation17 + $0x8] sm:$0xff]
        %s1257 = smul.u32 %s38, 8
        %s1258 = scalar_lea.vmem %s10, %s1257
        %v1259 = vld [vmem:[%s1258] sm:$0xff]
        %v1261 = vsel %vm920, %v1179, 0
        %v1264 = vsel %vm920, %v1252, 0
        %1266 = vmatprep.subr.mxu0 0.0
        %1267 = vmatpush1.msra.mxu0 %v1259
        %1268 = vmatprep.subr.mxu0 0.0
        %1269 = vmatpush1.msra.mxu0 0.0
        %1270 = vmatprep.subr.mxu0 0.0
        %1271 = vmatpush1.msra.mxu0 0.0
        %1272 = vmatprep.subr.mxu0 0.0
        %1273 = vmatpush1.msra.mxu0 0.0
        %1274 = vmatprep.subr.mxu0 0.0
        %1275 = vmatpush1.msra.mxu0 0.0
        %1276 = vmatprep.subr.mxu0 0.0
        %1277 = vmatpush1.msra.mxu0 0.0
        %1278 = vmatprep.subr.mxu0 0.0
        %1279 = vmatpush1.msra.mxu0 0.0
        %1280 = vmatprep.subr.mxu0 0.0
        %1281 = vmatpush1.msra.mxu0 0.0
        %1282 = vmatprep.subr.mxu0 0.0
        %1283 = vmatpush1.msra.mxu0 0.0
        %1284 = vmatprep.subr.mxu0 0.0
        %1285 = vmatpush1.msra.mxu0 0.0
        %1286 = vmatprep.subr.mxu0 0.0
        %1287 = vmatpush1.msra.mxu0 0.0
        %1288 = vmatprep.subr.mxu0 0.0
        %1289 = vmatpush1.msra.mxu0 0.0
        %1290 = vmatprep.subr.mxu0 0.0
        %1291 = vmatpush1.msra.mxu0 0.0
        %1292 = vmatprep.subr.mxu0 0.0
        %1293 = vmatpush1.msra.mxu0 0.0
        %1294 = vmatprep.subr.mxu0 0.0
        %1295 = vmatpush1.msra.mxu0 0.0
        %1296 = vmatprep.subr.mxu0 0.0
        %1297 = vmatpush1.msra.mxu0 0.0
        %1298 = vmatprep.subr.mxu0 0.0
        %1299 = vmatpush1.msra.mxu0 0.0
        %1300 = vmatprep.subr.mxu0 0.0
        %1301 = vmatpush1.msra.mxu0 0.0
        %1302 = vmatprep.subr.mxu0 0.0
        %1303 = vmatpush1.msra.mxu0 0.0
        %1304 = vmatprep.subr.mxu0 0.0
        %1305 = vmatpush1.msra.mxu0 0.0
        %1306 = vmatprep.subr.mxu0 0.0
        %1307 = vmatpush1.msra.mxu0 0.0
        %1308 = vmatprep.subr.mxu0 0.0
        %1309 = vmatpush1.msra.mxu0 0.0
        %1310 = vmatprep.subr.mxu0 0.0
        %1311 = vmatpush1.msra.mxu0 0.0
        %1312 = vmatprep.subr.mxu0 0.0
        %1313 = vmatpush1.msra.mxu0 0.0
        %1314 = vmatprep.subr.mxu0 0.0
        %1315 = vmatpush1.msra.mxu0 0.0
        %1316 = vmatprep.subr.mxu0 0.0
        %1317 = vmatpush1.msra.mxu0 0.0
        %1318 = vmatprep.subr.mxu0 0.0
        %1319 = vmatpush1.msra.mxu0 0.0
        %1320 = vmatprep.subr.mxu0 0.0
        %1321 = vmatpush1.msra.mxu0 0.0
        %1322 = vmatprep.subr.mxu0 0.0
        %1323 = vmatpush1.msra.mxu0 0.0
        %1324 = vmatprep.subr.mxu0 0.0
        %1325 = vmatpush1.msra.mxu0 0.0
        %1326 = vmatprep.subr.mxu0 0.0
        %1327 = vmatpush1.msra.mxu0 0.0
        %1328 = vmatprep.subr.mxu0 0.0
        %1329 = vmatpush1.msra.mxu0 0.0
        %1330 = vmatprep.mubr.f32.mxu0 0.0
        %1331 = vmatmul.mubr.f32.gmra.mrb[0].mxu0 %v1261
        %v1332 = vpop.f32.mrb[0].mxu0
        %v1333 = vadd.f32 0.0, %v1332
        %v1334 = vpop.f32.mrb[0].mxu0
        %1335 = vmatprep.mubr.f32.mxu0 0.0
        %1336 = vmatmul.mubr.f32.gmra.mrb[0].mxu0 %v1264
        %v1337 = vpop.f32.mrb[0].mxu0
        %v1338 = vadd.f32 0.0, %v1337
        %v1339 = vpop.f32.mrb[0].mxu0
        %1340 = vdwg.mxu0
        %v1341 = vadd.f32 %v1255, %v1333
        %v1342 = vadd.f32 %v1256, %v1338
        %vm1343 = vcmask 261120
        %1344 = vst.msk [vmem:[#allocation17] sm:$0xff] %vm1343, %v1341
        %1345 = vst.msk [vmem:[#allocation17 + $0x8] sm:$0xff] %vm1343, %v1342
        %s1346 = sand.u32 %s353, 1
        %s1347 = scalar_lea.sflag [#allocation19], %s1346
        %s1348 = sand.u32 %s353, 1
        %s1349 = smul.addr %s1348, 16
        %s1350 = scalar_lea.vmem [#allocation18], %s1349
        // Predicated region
        $region101: #{tpu_custom_call.1} parent=67 // pred_check
          %p1351 = pneg %p335
        $region102: #{tpu_custom_call.1} parent=67 // pred_check_branch
          %1353 = sbr.rel (%p1351) target = $region104
        $region103: #{tpu_custom_call.1} parent=67 // pred_region
          %s1354 = smul.u32 2, %s37
          %s1356 = ssub.s32 256, 256
          %1357 = vsyncadd [#allocation7], %s1356
          %s1358 = smul.addr %s1354, 128
          %s1359 = scalar_lea.hbm %s12, %s1358
          %s1360 = sshll.u32 [#allocation17], 4
          %s1361 = int_to_ptr.vmem [resolvable:$true] %s1360
          %1366 = dma.vmem_to_hbm [thread:$0]  %s1361, 256, %s1359, [#allocation7], 128, 128, 8
        $region104: #{tpu_custom_call.1} parent=67 // pred_fallthru
          _
        // Predicated region
        $region105: #{tpu_custom_call.1} parent=67 // pred_check
          %p1367 = pneg %p363
        $region106: #{tpu_custom_call.1} parent=67 // pred_check_branch
          %1369 = sbr.rel (%p1367) target = $region108
        $region107: #{tpu_custom_call.1} parent=67 // pred_region
          %s1370 = smul.u32 2, %s37
          %s1372 = ssub.s32 256, 256
          %1373 = vsyncadd %s1347, %s1372
          %s1374 = smul.addr %s38, 2
          %s1375 = sadd.s32 %s1370, %s1374
          %s1376 = smul.addr %s1375, 128
          %s1377 = scalar_lea.hbm %s13, %s1376
          %s1378 = sshll.u32 %s1350, 4
          %s1379 = int_to_ptr.vmem [resolvable:$true] %s1378
          %1384 = dma.vmem_to_hbm [thread:$0]  %s1379, 256, %s1377, %s1347, 128, 128, 8
        $region108: #{tpu_custom_call.1} parent=67 // pred_fallthru
          _
        // Predicated region
        $region109: #{tpu_custom_call.1} parent=67 // pred_check
          %p1385 = pneg %p335
        $region110: #{tpu_custom_call.1} parent=67 // pred_check_branch
          %1387 = sbr.rel (%p1385) target = $region112
        $region111: #{tpu_custom_call.1} parent=67 // pred_region
          %1388 = dma.done [#allocation7], 256
        $region112: #{tpu_custom_call.1} parent=67 // pred_fallthru
          _
      $region68: #{tpu_custom_call.1} parent=5 // pred_fallthru
        _
      %p1389 = scmp.le.s32.totalorder 2, %s28
      // Predicated region
      $region113: #{tpu_custom_call.1} parent=5 // pred_check
        %p1390 = pneg %p1389
      $region114: #{tpu_custom_call.1} parent=5 // pred_check_branch
        %1392 = sbr.rel (%p1390) target = $region116
      $region115: #{tpu_custom_call.1} parent=5 // pred_region
        %s1393 = ssub.s32 %s28, 2
        // Predicated region
        $region117: #{tpu_custom_call.1} parent=115 // pred_check
          %p1394 = pneg %p369
        $region118: #{tpu_custom_call.1} parent=115 // pred_check_branch
          %1396 = sbr.rel (%p1394) target = $region120
        $region119: #{tpu_custom_call.1} parent=115 // pred_region
          %s1397 = sand.u32 %s354, 1
          %s1398 = scalar_lea.sflag [#allocation19], %s1397
          %s1399 = sand.u32 %s354, 1
          %s1400 = smul.addr %s1399, 16
          %s1401 = scalar_lea.vmem [#allocation18], %s1400
          %1402 = dma.done %s1398, 256
        $region120: #{tpu_custom_call.1} parent=115 // pred_fallthru
          _
      $region116: #{tpu_custom_call.1} parent=5 // pred_fallthru
        _
    $region6: #{tpu_custom_call.1} parent=1 // loop_footer
      %s32 = sadd.s32 1, %s28
    $region7: #{tpu_custom_call.1} parent=1 // loop_footer_branch
      %27 = sbr.rel target = $region3
    $region8: #{tpu_custom_call.1} parent=1 // loop_exit
      _
    %1403 = vsyncpa [#allocation6], 1
    %s1404 = scalar_lea.sflag [#allocation6], 1
    %1405 = vsyncpa %s1404, 1
    %1406 = vsyncpa [#allocation9], 1
    %1407 = vsyncpa [#allocation12], 1
    %1408 = vsyncpa [#allocation15], 1
    %1409 = vsyncpa [#allocation7], 1
    %s1410 = scalar_lea.sflag [#allocation7], 1
    %1411 = vsyncpa %s1410, 1
    %1412 = vsyncpa [#allocation19], 1
    %s1413 = scalar_lea.sflag [#allocation19], 1
    %1414 = vsyncpa %s1413, 1

</llo_original>
